<compile_context>
chip_gen: v7x
topology: tpu7x:2x2x1
jax: 0.10.0
libtpu: 0.0.40
codegen_flags: <defaults>
</compile_context>

<pallas_src>
import functools

import jax
import jax.numpy as jnp
import numpy as np
from jax.experimental import pallas as pl
from jax.experimental.pallas import tpu as pltpu

LN_EPS = 1e-6  # nn.LayerNorm(output_ch, eps=1e-06)


# --------------------------------------------------------------------------- #
# Kernel
# --------------------------------------------------------------------------- #
def _tokenize_conv_kernel(x_ref, w_ref, cb_ref, g_ref, b_ref, o_ref, *, k):
    """Fused Conv1d(k, valid, bias) + (b c t -> b t c) + LayerNorm(eps=1e-6).

    x_ref  : (B, T, Cin)      bf16, channels-last
    w_ref  : (k, Cin, Cout)   bf16  (PyTorch (Cout, Cin, k) permuted)
    cb_ref : (1, Cout) f32    conv bias
    g_ref  : (1, Cout) f32    LayerNorm weight
    b_ref  : (1, Cout) f32    LayerNorm bias
    o_ref  : (B, Tout, Cout)  f32, Tout = T - k + 1
    """
    B, _, Cin = x_ref.shape
    Tout, Cout = o_ref.shape[1], o_ref.shape[2]

    x = x_ref[...]                                      # single VMEM load
    acc = jnp.zeros((B * Tout, Cout), jnp.float32)
    for j in range(k):                                  # k dots, each M = B*Tout
        xs = x[:, j:j + Tout, :].reshape(B * Tout, Cin)
        acc = acc + jnp.dot(xs, w_ref[j], preferred_element_type=jnp.float32)

    y = acc + cb_ref[...]                               # conv bias
    # LayerNorm over the channel (lane) axis, biased variance, eps inside sqrt.
    mean = jnp.mean(y, axis=-1, keepdims=True)
    var = jnp.mean((y - mean) ** 2, axis=-1, keepdims=True)
    y = (y - mean) * jax.lax.rsqrt(var + LN_EPS)
    y = y * g_ref[...] + b_ref[...]
    o_ref[...] = y.reshape(B, Tout, Cout)


# --------------------------------------------------------------------------- #
# Wrapper
# --------------------------------------------------------------------------- #
_VMEM = pl.BlockSpec(memory_space=pltpu.MemorySpace.VMEM)


def tokenize_conv_forward(x, params, *, k):
    """x: (B, Cin, T) float32 (PyTorch Conv1d layout).  Returns (B, T-k+1, Cout) f32."""
    B, Cin, T = x.shape
    Tout = T - k + 1
    w = params["conv_w"]                                # (Cout, Cin, k) torch layout
    Cout = w.shape[0]

    xt = jnp.transpose(x, (0, 2, 1)).astype(jnp.bfloat16)   # (B, T, Cin) channels-last
    wk = jnp.transpose(w, (2, 1, 0)).astype(jnp.bfloat16)   # (k, Cin, Cout)

    # TODO(synk): for B*T large enough to exceed VMEM, add a grid over B (or
    # B*Tout tiles) with BlockSpecs; LayerNorm is per-row so no cross-block
    # reduction is needed.
    return pl.pallas_call(
        functools.partial(_tokenize_conv_kernel, k=k),
        out_shape=jax.ShapeDtypeStruct((B, Tout, Cout), jnp.float32),
        in_specs=[_VMEM] * 5,
        out_specs=_VMEM,
    )(xt, wk,
      params["conv_b"].reshape(1, Cout),
      params["ln_g"].reshape(1, Cout),
      params["ln_b"].reshape(1, Cout))


# --------------------------------------------------------------------------- #
# Deterministic parameter init (shapes from TokenizeConv.__init__)
# --------------------------------------------------------------------------- #
def init_params(key, *, input_ch, output_ch, k):
    k1, k2, k3, k4 = jax.random.split(key, 4)
    bound = 1.0 / np.sqrt(input_ch * k)
    return {
        # conv.weight (Cout, Cin, k), conv.bias (Cout,)
        "conv_w": jax.random.uniform(k1, (output_ch, input_ch, k), jnp.float32, -bound, bound),
        "conv_b": jax.random.uniform(k2, (output_ch,), jnp.float32, -bound, bound),
        # LayerNorm defaults are weight=1 / bias=0; perturb so the test
        # exercises the affine path.
        "ln_g": 1.0 + 0.1 * jax.random.normal(k3, (output_ch,), jnp.float32),
        "ln_b": 0.1 * jax.random.normal(k4, (output_ch,), jnp.float32),
    }


# --------------------------------------------------------------------------- #
# Pure-JAX reference (mirrors the PyTorch forward)
# --------------------------------------------------------------------------- #
def ref_forward(x, params, *, k):
    y = jax.lax.conv_general_dilated(
        x, params["conv_w"], window_strides=(1,), padding="VALID",
        dimension_numbers=("NCH", "OIH", "NCH"),
        precision=jax.lax.Precision.HIGHEST)
    y = y + params["conv_b"][None, :, None]
    y = jnp.transpose(y, (0, 2, 1))                     # 'b c t -> b t c'
    m = jnp.mean(y, axis=-1, keepdims=True)
    v = jnp.mean((y - m) ** 2, axis=-1, keepdims=True)
    return (y - m) * jax.lax.rsqrt(v + LN_EPS) * params["ln_g"] + params["ln_b"]


# --------------------------------------------------------------------------- #
if __name__ == "__main__":
    key = jax.random.PRNGKey(0)
    kx, kp = jax.random.split(key)

    # Small shapes consistent with the module: (B, input_ch, T), k=3.
    B, Cin, T, Cout, K = 4, 16, 66, 128, 3
    x = jax.random.normal(kx, (B, Cin, T), jnp.float32)
    params = init_params(kp, input_ch=Cin, output_ch=Cout, k=K)

    fwd = jax.jit(functools.partial(tokenize_conv_forward, k=K))
    out = jax.block_until_ready(fwd(x, params))
    assert out.shape == (B, T - K + 1, Cout), out.shape

    ref = ref_forward(x, params, k=K)
    np.testing.assert_allclose(np.asarray(out), np.asarray(ref), atol=2e-2, rtol=2e-2)

    print("KERNEL_OK")
</pallas_src>

<mosaic_0001>
module attributes {stable_mosaic.version = 11 : i64} {
  func.func @_tokenize_conv_kernel(%arg0: memref<4x66x16xbf16, #tpu.memory_space<vmem>>, %arg1: memref<3x16x128xbf16, #tpu.memory_space<vmem>>, %arg2: memref<1x128xf32, #tpu.memory_space<vmem>>, %arg3: memref<1x128xf32, #tpu.memory_space<vmem>>, %arg4: memref<1x128xf32, #tpu.memory_space<vmem>>, %arg5: memref<4x64x128xf32, #tpu.memory_space<vmem>>) attributes {dimension_semantics = [], scalar_prefetch = 0 : i64, scratch_operands = 0 : i64, tpu.core_type = #tpu.core_type<tc>} {
    %c0 = arith.constant 0 : index
    %c0_0 = arith.constant 0 : index
    %c0_1 = arith.constant 0 : index
    %0 = vector.load %arg0[%c0, %c0_0, %c0_1] : memref<4x66x16xbf16, #tpu.memory_space<vmem>>, vector<4x66x16xbf16>
    %cst = arith.constant 0.000000e+00 : f32
    %1 = vector.broadcast %cst : f32 to vector<256x128xf32>
    %2 = vector.extract_strided_slice %0 {offsets = [0, 0, 0], sizes = [4, 64, 16], strides = [1, 1, 1]} : vector<4x66x16xbf16> to vector<4x64x16xbf16>
    %3 = vector.shape_cast %2 : vector<4x64x16xbf16> to vector<256x16xbf16>
    %c0_2 = arith.constant 0 : index
    %c0_3 = arith.constant 0 : index
    %c0_4 = arith.constant 0 : index
    %4 = vector.load %arg1[%c0_2, %c0_3, %c0_4] : memref<3x16x128xbf16, #tpu.memory_space<vmem>>, vector<1x16x128xbf16>
    %5 = vector.shape_cast %4 : vector<1x16x128xbf16> to vector<16x128xbf16>
    %cst_5 = arith.constant dense<0.000000e+00> : vector<256x128xf32>
    %6 = tpu.matmul %3, %5, %cst_5 {dimension_numbers = #tpu.dot_dimension_numbers<[1], [0], [0], [1], [0, 0, 1, 1], [], []>} : vector<256x16xbf16>, vector<16x128xbf16>, vector<256x128xf32> -> vector<256x128xf32>
    %7 = arith.addf %1, %6 : vector<256x128xf32>
    %8 = vector.extract_strided_slice %0 {offsets = [0, 1, 0], sizes = [4, 64, 16], strides = [1, 1, 1]} : vector<4x66x16xbf16> to vector<4x64x16xbf16>
    %9 = vector.shape_cast %8 : vector<4x64x16xbf16> to vector<256x16xbf16>
    %c1 = arith.constant 1 : index
    %c0_6 = arith.constant 0 : index
    %c0_7 = arith.constant 0 : index
    %10 = vector.load %arg1[%c1, %c0_6, %c0_7] : memref<3x16x128xbf16, #tpu.memory_space<vmem>>, vector<1x16x128xbf16>
    %11 = vector.shape_cast %10 : vector<1x16x128xbf16> to vector<16x128xbf16>
    %cst_8 = arith.constant dense<0.000000e+00> : vector<256x128xf32>
    %12 = tpu.matmul %9, %11, %cst_8 {dimension_numbers = #tpu.dot_dimension_numbers<[1], [0], [0], [1], [0, 0, 1, 1], [], []>} : vector<256x16xbf16>, vector<16x128xbf16>, vector<256x128xf32> -> vector<256x128xf32>
    %13 = arith.addf %7, %12 : vector<256x128xf32>
    %14 = vector.extract_strided_slice %0 {offsets = [0, 2, 0], sizes = [4, 64, 16], strides = [1, 1, 1]} : vector<4x66x16xbf16> to vector<4x64x16xbf16>
    %15 = vector.shape_cast %14 : vector<4x64x16xbf16> to vector<256x16xbf16>
    %c2 = arith.constant 2 : index
    %c0_9 = arith.constant 0 : index
    %c0_10 = arith.constant 0 : index
    %16 = vector.load %arg1[%c2, %c0_9, %c0_10] : memref<3x16x128xbf16, #tpu.memory_space<vmem>>, vector<1x16x128xbf16>
    %17 = vector.shape_cast %16 : vector<1x16x128xbf16> to vector<16x128xbf16>
    %cst_11 = arith.constant dense<0.000000e+00> : vector<256x128xf32>
    %18 = tpu.matmul %15, %17, %cst_11 {dimension_numbers = #tpu.dot_dimension_numbers<[1], [0], [0], [1], [0, 0, 1, 1], [], []>} : vector<256x16xbf16>, vector<16x128xbf16>, vector<256x128xf32> -> vector<256x128xf32>
    %19 = arith.addf %13, %18 : vector<256x128xf32>
    %c0_12 = arith.constant 0 : index
    %c0_13 = arith.constant 0 : index
    %20 = vector.load %arg2[%c0_12, %c0_13] : memref<1x128xf32, #tpu.memory_space<vmem>>, vector<1x128xf32>
    %21 = vector.broadcast %20 : vector<1x128xf32> to vector<256x128xf32>
    %22 = arith.addf %19, %21 : vector<256x128xf32>
    %cst_14 = arith.constant dense<0.000000e+00> : vector<256xf32>
    %23 = vector.multi_reduction <add>, %22, %cst_14 [1] : vector<256x128xf32> to vector<256xf32>
    %24 = vector.shape_cast %23 : vector<256xf32> to vector<256x1xf32>
    %cst_15 = arith.constant 1.280000e+02 : f32
    %25 = vector.broadcast %cst_15 : f32 to vector<256x1xf32>
    %26 = arith.divf %24, %25 : vector<256x1xf32>
    %27 = vector.broadcast %26 : vector<256x1xf32> to vector<256x128xf32>
    %28 = arith.subf %22, %27 : vector<256x128xf32>
    %29 = arith.mulf %28, %28 : vector<256x128xf32>
    %cst_16 = arith.constant dense<0.000000e+00> : vector<256xf32>
    %30 = vector.multi_reduction <add>, %29, %cst_16 [1] : vector<256x128xf32> to vector<256xf32>
    %31 = vector.shape_cast %30 : vector<256xf32> to vector<256x1xf32>
    %cst_17 = arith.constant 1.280000e+02 : f32
    %32 = vector.broadcast %cst_17 : f32 to vector<256x1xf32>
    %33 = arith.divf %31, %32 : vector<256x1xf32>
    %34 = vector.broadcast %26 : vector<256x1xf32> to vector<256x128xf32>
    %35 = arith.subf %22, %34 : vector<256x128xf32>
    %cst_18 = arith.constant 9.99999997E-7 : f32
    %36 = vector.broadcast %cst_18 : f32 to vector<256x1xf32>
    %37 = arith.addf %33, %36 : vector<256x1xf32>
    %38 = math.rsqrt %37 : vector<256x1xf32>
    %39 = vector.broadcast %38 : vector<256x1xf32> to vector<256x128xf32>
    %40 = arith.mulf %35, %39 : vector<256x128xf32>
    %c0_19 = arith.constant 0 : index
    %c0_20 = arith.constant 0 : index
    %41 = vector.load %arg3[%c0_19, %c0_20] : memref<1x128xf32, #tpu.memory_space<vmem>>, vector<1x128xf32>
    %42 = vector.broadcast %41 : vector<1x128xf32> to vector<256x128xf32>
    %43 = arith.mulf %40, %42 : vector<256x128xf32>
    %c0_21 = arith.constant 0 : index
    %c0_22 = arith.constant 0 : index
    %44 = vector.load %arg4[%c0_21, %c0_22] : memref<1x128xf32, #tpu.memory_space<vmem>>, vector<1x128xf32>
    %45 = vector.broadcast %44 : vector<1x128xf32> to vector<256x128xf32>
    %46 = arith.addf %43, %45 : vector<256x128xf32>
    %47 = vector.shape_cast %46 : vector<256x128xf32> to vector<4x64x128xf32>
    %c0_23 = arith.constant 0 : index
    %c0_24 = arith.constant 0 : index
    %c0_25 = arith.constant 0 : index
    %48 = vector.load %arg5[%c0_23, %c0_24, %c0_25] : memref<4x64x128xf32, #tpu.memory_space<vmem>>, vector<4x64x128xf32>
    tpu.vector_store %arg5[%c0_23, %c0_24, %c0_25], %47 {strides = array<i32>} : memref<4x64x128xf32, #tpu.memory_space<vmem>>, vector<4x64x128xf32>,
    return
  }
}

</mosaic_0001>

<llo_original>
// kernel: tokenize_conv_forward.1
$region0: #{tokenize_conv_forward.1}
  #allocation0 [shape = 'u32[]', space=smem, size = 0x4, offset = 0x4, fixed_abs, tag = 'smem constant byte address 0x4 - core index']
  #allocation1 [shape = 'u32[144,128]{1,0:T(1,128)}', space=vmem, size = 0x12000, scoped, tag = 'internal scratch']
  %s0 = inlined_call_operand.vmem [shape: bf16[4,66,16], index: 0, kind: input, shape index: {}]
  %s1 = inlined_call_operand.vmem [shape: bf16[3,16,128], index: 1, kind: input, shape index: {}]
  %s2 = inlined_call_operand.vmem [shape: f32[1,128], index: 2, kind: input, shape index: {}]
  %s3 = inlined_call_operand.vmem [shape: f32[1,128], index: 3, kind: input, shape index: {}]
  %s4 = inlined_call_operand.vmem [shape: f32[1,128], index: 4, kind: input, shape index: {}]
  %s5 = inlined_call_operand.hbm [shape: f32[4,64,128], index: 5, kind: output, shape index: {}]
  %s6 = sld [smem:[#allocation0]]
  $region30: #{tokenize_conv_forward.1} parent=0
    _
  %s8 = ssub.s32 1, %s6
  %s9 = scalar_select 0, %s8, %s6
  $region1: #{tokenize_conv_forward.1} parent=0
    #allocation2 [shape = 'u8[131072]{0}', space=vmem, size = 0x20000, scoped, tag = 'output window, operand 0, single buffered']
    #allocation3 [shape = 's32[1]{0}', space=sflag, size = 0x4, scoped, tag = 'scoped memory for tokenize_conv_forward.1']
    %10 = vsyncpa [#allocation3], 0
    // Predicated region
    $region2: #{tokenize_conv_forward.1} parent=1 // pred_check
      _
    $region3: #{tokenize_conv_forward.1} parent=1 // pred_check_branch
      %12 = sbr.rel (0) target = $region5
    $region4: #{tokenize_conv_forward.1} parent=1 // pred_region
      _
    $region5: #{tokenize_conv_forward.1} parent=1 // pred_fallthru
      _
    // Predicated region
    $region6: #{tokenize_conv_forward.1} parent=1 // pred_check
      _
    $region7: #{tokenize_conv_forward.1} parent=1 // pred_check_branch
      %14 = sbr.rel (0) target = $region9
    $region8: #{tokenize_conv_forward.1} parent=1 // pred_region
      _
    $region9: #{tokenize_conv_forward.1} parent=1 // pred_fallthru
      _
    // Predicated region
    $region10: #{tokenize_conv_forward.1} parent=1 // pred_check
      _
    $region11: #{tokenize_conv_forward.1} parent=1 // pred_check_branch
      %16 = sbr.rel (0) target = $region13
    $region12: #{tokenize_conv_forward.1} parent=1 // pred_region
      _
    $region13: #{tokenize_conv_forward.1} parent=1 // pred_fallthru
      _
    // Predicated region
    $region14: #{tokenize_conv_forward.1} parent=1 // pred_check
      _
    $region15: #{tokenize_conv_forward.1} parent=1 // pred_check_branch
      %18 = sbr.rel (0) target = $region17
    $region16: #{tokenize_conv_forward.1} parent=1 // pred_region
      _
    $region17: #{tokenize_conv_forward.1} parent=1 // pred_fallthru
      _
    // Predicated region
    $region18: #{tokenize_conv_forward.1} parent=1 // pred_check
      _
    $region19: #{tokenize_conv_forward.1} parent=1 // pred_check_branch
      %20 = sbr.rel (0) target = $region21
    $region20: #{tokenize_conv_forward.1} parent=1 // pred_region
      _
    $region21: #{tokenize_conv_forward.1} parent=1 // pred_fallthru
      _
    %v22 = vld [vmem:[%s0] sm:$0xf]
    %v23 = vld [vmem:[%s0 + $0x4] sm:$0xf]
    %v24 = vld [vmem:[%s0 + $0x8] sm:$0xf]
    %v25 = vld [vmem:[%s0 + $0xc] sm:$0xf]
    %v26 = vld [vmem:[%s0 + $0x10] sm:$0xf]
    %v27 = vld [vmem:[%s0 + $0x14] sm:$0xf]
    %v28 = vld [vmem:[%s0 + $0x18] sm:$0xf]
    %v29 = vld [vmem:[%s0 + $0x1c] sm:$0xf]
    %v30 = vld [vmem:[%s0 + $0x20] sm:$0x1]
    %v31 = vld [vmem:[%s0 + $0x24] sm:$0xf]
    %v32 = vld [vmem:[%s0 + $0x28] sm:$0xf]
    %v33 = vld [vmem:[%s0 + $0x2c] sm:$0xf]
    %v34 = vld [vmem:[%s0 + $0x30] sm:$0xf]
    %v35 = vld [vmem:[%s0 + $0x34] sm:$0xf]
    %v36 = vld [vmem:[%s0 + $0x38] sm:$0xf]
    %v37 = vld [vmem:[%s0 + $0x3c] sm:$0xf]
    %v38 = vld [vmem:[%s0 + $0x40] sm:$0xf]
    %v39 = vld [vmem:[%s0 + $0x44] sm:$0x1]
    %v40 = vld [vmem:[%s0 + $0x48] sm:$0xf]
    %v41 = vld [vmem:[%s0 + $0x4c] sm:$0xf]
    %v42 = vld [vmem:[%s0 + $0x50] sm:$0xf]
    %v43 = vld [vmem:[%s0 + $0x54] sm:$0xf]
    %v44 = vld [vmem:[%s0 + $0x58] sm:$0xf]
    %v45 = vld [vmem:[%s0 + $0x5c] sm:$0xf]
    %v46 = vld [vmem:[%s0 + $0x60] sm:$0xf]
    %v47 = vld [vmem:[%s0 + $0x64] sm:$0xf]
    %v48 = vld [vmem:[%s0 + $0x68] sm:$0x1]
    %v49 = vld [vmem:[%s0 + $0x6c] sm:$0xf]
    %v50 = vld [vmem:[%s0 + $0x70] sm:$0xf]
    %v51 = vld [vmem:[%s0 + $0x74] sm:$0xf]
    %v52 = vld [vmem:[%s0 + $0x78] sm:$0xf]
    %v53 = vld [vmem:[%s0 + $0x7c] sm:$0xf]
    %v54 = vld [vmem:[%s0 + $0x80] sm:$0xf]
    %v55 = vld [vmem:[%s0 + $0x84] sm:$0xf]
    %v56 = vld [vmem:[%s0 + $0x88] sm:$0xf]
    %v57 = vld [vmem:[%s0 + $0x8c] sm:$0x1]
    %v58 = vld [vmem:[%s1] sm:$0xf]
    %v59 = vld [vmem:[%s1 + $0x4] sm:$0xf]
    %vm60 = vsmask.f32 3328
    %vm61 = vsmask.f32 7440
    %vm62 = vmor %vm60, %vm61
    %v64 = vshrl.u32 %v22, 16
    %v66 = vrot.slane %v64, 4
    %v67 = vshll.u32 %v22, 16
    %v69 = vrot.slane %v67, 5
    %v70 = vor.u32 %v66, %v69
    %v71 = vrot.slane %v70, 4
    %v73 = vshll.u32 %v23, 16
    %v75 = vrot.slane %v73, 5
    %v76 = vsel %vm62, %v71, %v75
    %v77 = vshrl.u32 %v23, 16
    %v79 = vrot.slane %v77, 4
    %v80 = vor.u32 %v79, %v75
    %v81 = vrot.slane %v80, 4
    %v83 = vshll.u32 %v24, 16
    %v85 = vrot.slane %v83, 5
    %v86 = vsel %vm62, %v81, %v85
    %v87 = vshrl.u32 %v24, 16
    %v89 = vrot.slane %v87, 4
    %v90 = vor.u32 %v89, %v85
    %v91 = vrot.slane %v90, 4
    %v93 = vshll.u32 %v25, 16
    %v95 = vrot.slane %v93, 5
    %v96 = vsel %vm62, %v91, %v95
    %v97 = vshrl.u32 %v25, 16
    %v99 = vrot.slane %v97, 4
    %v100 = vor.u32 %v99, %v95
    %v101 = vrot.slane %v100, 4
    %v103 = vshll.u32 %v26, 16
    %v105 = vrot.slane %v103, 5
    %v106 = vsel %vm62, %v101, %v105
    %v107 = vshrl.u32 %v26, 16
    %v109 = vrot.slane %v107, 4
    %v110 = vor.u32 %v109, %v105
    %v111 = vrot.slane %v110, 4
    %v113 = vshll.u32 %v27, 16
    %v115 = vrot.slane %v113, 5
    %v116 = vsel %vm62, %v111, %v115
    %v117 = vshrl.u32 %v27, 16
    %v119 = vrot.slane %v117, 4
    %v120 = vor.u32 %v119, %v115
    %v121 = vrot.slane %v120, 4
    %v123 = vshll.u32 %v28, 16
    %v125 = vrot.slane %v123, 5
    %v126 = vsel %vm62, %v121, %v125
    %v127 = vshrl.u32 %v28, 16
    %v129 = vrot.slane %v127, 4
    %v130 = vor.u32 %v129, %v125
    %v131 = vrot.slane %v130, 4
    %v133 = vshll.u32 %v29, 16
    %v135 = vrot.slane %v133, 5
    %v136 = vsel %vm62, %v131, %v135
    %v137 = vshrl.u32 %v29, 16
    %v139 = vrot.slane %v137, 4
    %v140 = vor.u32 %v139, %v135
    %v141 = vrot.slane %v140, 4
    %v143 = vshll.u32 %v30, 16
    %v145 = vrot.slane %v143, 5
    %v146 = vsel %vm62, %v141, %v145
    %v148 = vshrl.u32 %v31, 16
    %v150 = vrot.slane %v148, 4
    %v151 = vshll.u32 %v31, 16
    %v153 = vrot.slane %v151, 5
    %v154 = vor.u32 %v150, %v153
    %v155 = vrot.slane %v154, 4
    %v157 = vshll.u32 %v32, 16
    %v159 = vrot.slane %v157, 5
    %v160 = vsel %vm62, %v155, %v159
    %v161 = vshrl.u32 %v32, 16
    %v163 = vrot.slane %v161, 4
    %v164 = vor.u32 %v163, %v159
    %v165 = vrot.slane %v164, 4
    %v167 = vshll.u32 %v33, 16
    %v169 = vrot.slane %v167, 5
    %v170 = vsel %vm62, %v165, %v169
    %v171 = vshrl.u32 %v33, 16
    %v173 = vrot.slane %v171, 4
    %v174 = vor.u32 %v173, %v169
    %v175 = vrot.slane %v174, 4
    %v177 = vshll.u32 %v34, 16
    %v179 = vrot.slane %v177, 5
    %v180 = vsel %vm62, %v175, %v179
    %v181 = vshrl.u32 %v34, 16
    %v183 = vrot.slane %v181, 4
    %v184 = vor.u32 %v183, %v179
    %v185 = vrot.slane %v184, 4
    %v187 = vshll.u32 %v35, 16
    %v189 = vrot.slane %v187, 5
    %v190 = vsel %vm62, %v185, %v189
    %v191 = vshrl.u32 %v35, 16
    %v193 = vrot.slane %v191, 4
    %v194 = vor.u32 %v193, %v189
    %v195 = vrot.slane %v194, 4
    %v197 = vshll.u32 %v36, 16
    %v199 = vrot.slane %v197, 5
    %v200 = vsel %vm62, %v195, %v199
    %v201 = vshrl.u32 %v36, 16
    %v203 = vrot.slane %v201, 4
    %v204 = vor.u32 %v203, %v199
    %v205 = vrot.slane %v204, 4
    %v207 = vshll.u32 %v37, 16
    %v209 = vrot.slane %v207, 5
    %v210 = vsel %vm62, %v205, %v209
    %v211 = vshrl.u32 %v37, 16
    %v213 = vrot.slane %v211, 4
    %v214 = vor.u32 %v213, %v209
    %v215 = vrot.slane %v214, 4
    %v217 = vshll.u32 %v38, 16
    %v219 = vrot.slane %v217, 5
    %v220 = vsel %vm62, %v215, %v219
    %v221 = vshrl.u32 %v38, 16
    %v223 = vrot.slane %v221, 4
    %v224 = vor.u32 %v223, %v219
    %v225 = vrot.slane %v224, 4
    %v227 = vshll.u32 %v39, 16
    %v229 = vrot.slane %v227, 5
    %v230 = vsel %vm62, %v225, %v229
    %v232 = vshrl.u32 %v40, 16
    %v234 = vrot.slane %v232, 4
    %v235 = vshll.u32 %v40, 16
    %v237 = vrot.slane %v235, 5
    %v238 = vor.u32 %v234, %v237
    %v239 = vrot.slane %v238, 4
    %v241 = vshll.u32 %v41, 16
    %v243 = vrot.slane %v241, 5
    %v244 = vsel %vm62, %v239, %v243
    %v245 = vshrl.u32 %v41, 16
    %v247 = vrot.slane %v245, 4
    %v248 = vor.u32 %v247, %v243
    %v249 = vrot.slane %v248, 4
    %v251 = vshll.u32 %v42, 16
    %v253 = vrot.slane %v251, 5
    %v254 = vsel %vm62, %v249, %v253
    %v255 = vshrl.u32 %v42, 16
    %v257 = vrot.slane %v255, 4
    %v258 = vor.u32 %v257, %v253
    %v259 = vrot.slane %v258, 4
    %v261 = vshll.u32 %v43, 16
    %v263 = vrot.slane %v261, 5
    %v264 = vsel %vm62, %v259, %v263
    %v265 = vshrl.u32 %v43, 16
    %v267 = vrot.slane %v265, 4
    %v268 = vor.u32 %v267, %v263
    %v269 = vrot.slane %v268, 4
    %v271 = vshll.u32 %v44, 16
    %v273 = vrot.slane %v271, 5
    %v274 = vsel %vm62, %v269, %v273
    %v275 = vshrl.u32 %v44, 16
    %v277 = vrot.slane %v275, 4
    %v278 = vor.u32 %v277, %v273
    %v279 = vrot.slane %v278, 4
    %v281 = vshll.u32 %v45, 16
    %v283 = vrot.slane %v281, 5
    %v284 = vsel %vm62, %v279, %v283
    %v285 = vshrl.u32 %v45, 16
    %v287 = vrot.slane %v285, 4
    %v288 = vor.u32 %v287, %v283
    %v289 = vrot.slane %v288, 4
    %v291 = vshll.u32 %v46, 16
    %v293 = vrot.slane %v291, 5
    %v294 = vsel %vm62, %v289, %v293
    %v295 = vshrl.u32 %v46, 16
    %v297 = vrot.slane %v295, 4
    %v298 = vor.u32 %v297, %v293
    %v299 = vrot.slane %v298, 4
    %v301 = vshll.u32 %v47, 16
    %v303 = vrot.slane %v301, 5
    %v304 = vsel %vm62, %v299, %v303
    %v305 = vshrl.u32 %v47, 16
    %v307 = vrot.slane %v305, 4
    %v308 = vor.u32 %v307, %v303
    %v309 = vrot.slane %v308, 4
    %v311 = vshll.u32 %v48, 16
    %v313 = vrot.slane %v311, 5
    %v314 = vsel %vm62, %v309, %v313
    %v316 = vshrl.u32 %v49, 16
    %v318 = vrot.slane %v316, 4
    %v319 = vshll.u32 %v49, 16
    %v321 = vrot.slane %v319, 5
    %v322 = vor.u32 %v318, %v321
    %v323 = vrot.slane %v322, 4
    %v325 = vshll.u32 %v50, 16
    %v327 = vrot.slane %v325, 5
    %v328 = vsel %vm62, %v323, %v327
    %v329 = vshrl.u32 %v50, 16
    %v331 = vrot.slane %v329, 4
    %v332 = vor.u32 %v331, %v327
    %v333 = vrot.slane %v332, 4
    %v335 = vshll.u32 %v51, 16
    %v337 = vrot.slane %v335, 5
    %v338 = vsel %vm62, %v333, %v337
    %v339 = vshrl.u32 %v51, 16
    %v341 = vrot.slane %v339, 4
    %v342 = vor.u32 %v341, %v337
    %v343 = vrot.slane %v342, 4
    %v345 = vshll.u32 %v52, 16
    %v347 = vrot.slane %v345, 5
    %v348 = vsel %vm62, %v343, %v347
    %v349 = vshrl.u32 %v52, 16
    %v351 = vrot.slane %v349, 4
    %v352 = vor.u32 %v351, %v347
    %v353 = vrot.slane %v352, 4
    %v355 = vshll.u32 %v53, 16
    %v357 = vrot.slane %v355, 5
    %v358 = vsel %vm62, %v353, %v357
    %v359 = vshrl.u32 %v53, 16
    %v361 = vrot.slane %v359, 4
    %v362 = vor.u32 %v361, %v357
    %v363 = vrot.slane %v362, 4
    %v365 = vshll.u32 %v54, 16
    %v367 = vrot.slane %v365, 5
    %v368 = vsel %vm62, %v363, %v367
    %v369 = vshrl.u32 %v54, 16
    %v371 = vrot.slane %v369, 4
    %v372 = vor.u32 %v371, %v367
    %v373 = vrot.slane %v372, 4
    %v375 = vshll.u32 %v55, 16
    %v377 = vrot.slane %v375, 5
    %v378 = vsel %vm62, %v373, %v377
    %v379 = vshrl.u32 %v55, 16
    %v381 = vrot.slane %v379, 4
    %v382 = vor.u32 %v381, %v377
    %v383 = vrot.slane %v382, 4
    %v385 = vshll.u32 %v56, 16
    %v387 = vrot.slane %v385, 5
    %v388 = vsel %vm62, %v383, %v387
    %v389 = vshrl.u32 %v56, 16
    %v391 = vrot.slane %v389, 4
    %v392 = vor.u32 %v391, %v387
    %v393 = vrot.slane %v392, 4
    %v395 = vshll.u32 %v57, 16
    %v397 = vrot.slane %v395, 5
    %v398 = vsel %vm62, %v393, %v397
    %s399 = scalar_lea.vmem %s1, 8
    %v400 = vld [vmem:[%s399] sm:$0xf]
    %v401 = vld [vmem:[%s399 + $0x4] sm:$0xf]
    %v402 = vunpack.c.l.b16 %v76
    %v403 = vunpack.c.l.b16 %v86
    %v404 = vunpack.c.l.b16 %v96
    %v405 = vunpack.c.l.b16 %v106
    %v406 = vunpack.c.l.b16 %v116
    %v407 = vunpack.c.l.b16 %v126
    %v408 = vunpack.c.l.b16 %v136
    %v409 = vunpack.c.l.b16 %v146
    %v410 = vunpack.c.l.b16 %v160
    %v411 = vunpack.c.l.b16 %v170
    %v412 = vunpack.c.l.b16 %v180
    %v413 = vunpack.c.l.b16 %v190
    %v414 = vunpack.c.l.b16 %v200
    %v415 = vunpack.c.l.b16 %v210
    %v416 = vunpack.c.l.b16 %v220
    %v417 = vunpack.c.l.b16 %v230
    %v418 = vunpack.c.l.b16 %v244
    %v419 = vunpack.c.l.b16 %v254
    %v420 = vunpack.c.l.b16 %v264
    %v421 = vunpack.c.l.b16 %v274
    %v422 = vunpack.c.l.b16 %v284
    %v423 = vunpack.c.l.b16 %v294
    %v424 = vunpack.c.l.b16 %v304
    %v425 = vunpack.c.l.b16 %v314
    %v426 = vunpack.c.l.b16 %v328
    %v427 = vunpack.c.l.b16 %v338
    %v428 = vunpack.c.l.b16 %v348
    %v429 = vunpack.c.l.b16 %v358
    %v430 = vunpack.c.l.b16 %v368
    %v431 = vunpack.c.l.b16 %v378
    %v432 = vunpack.c.l.b16 %v388
    %v433 = vunpack.c.l.b16 %v398
    %v434 = vpack.c.b16 %v403, %v402
    %v435 = vpack.c.b16 %v405, %v404
    %v436 = vpack.c.b16 %v407, %v406
    %v437 = vpack.c.b16 %v409, %v408
    %v438 = vpack.c.b16 %v411, %v410
    %v439 = vpack.c.b16 %v413, %v412
    %v440 = vpack.c.b16 %v415, %v414
    %v441 = vpack.c.b16 %v417, %v416
    %v442 = vpack.c.b16 %v419, %v418
    %v443 = vpack.c.b16 %v421, %v420
    %v444 = vpack.c.b16 %v423, %v422
    %v445 = vpack.c.b16 %v425, %v424
    %v446 = vpack.c.b16 %v427, %v426
    %v447 = vpack.c.b16 %v429, %v428
    %v448 = vpack.c.b16 %v431, %v430
    %v449 = vpack.c.b16 %v433, %v432
    %v452 = vunpack.c.l.b16 %v400
    %v453 = vunpack.c.l.b16 %v401
    %v454 = vpack.c.b16 %v453, %v452
    %vm456 = vcmask 130048
    %v458 = vsel %vm456, %v434, 0
    %v461 = vsel %vm456, %v435, 0
    %v464 = vsel %vm456, %v436, 0
    %v467 = vsel %vm456, %v437, 0
    %v470 = vsel %vm456, %v438, 0
    %v473 = vsel %vm456, %v439, 0
    %v476 = vsel %vm456, %v440, 0
    %v479 = vsel %vm456, %v441, 0
    %v482 = vsel %vm456, %v442, 0
    %v485 = vsel %vm456, %v443, 0
    %v488 = vsel %vm456, %v444, 0
    %v491 = vsel %vm456, %v445, 0
    %v494 = vsel %vm456, %v446, 0
    %v497 = vsel %vm456, %v447, 0
    %v500 = vsel %vm456, %v448, 0
    %v503 = vsel %vm456, %v449, 0
    %505 = vmatprep.subr.bf16.mxu0 0
    %506 = vmatpush1.bf16.msra.mxu0 %v454
    %507 = vmatprep.subr.bf16.mxu0 0
    %508 = vmatpush1.bf16.msra.mxu0 0
    %509 = vmatprep.subr.bf16.mxu0 0
    %510 = vmatpush1.bf16.msra.mxu0 0
    %511 = vmatprep.subr.bf16.mxu0 0
    %512 = vmatpush1.bf16.msra.mxu0 0
    %513 = vmatprep.subr.bf16.mxu0 0
    %514 = vmatpush1.bf16.msra.mxu0 0
    %515 = vmatprep.subr.bf16.mxu0 0
    %516 = vmatpush1.bf16.msra.mxu0 0
    %517 = vmatprep.subr.bf16.mxu0 0
    %518 = vmatpush1.bf16.msra.mxu0 0
    %519 = vmatprep.subr.bf16.mxu0 0
    %520 = vmatpush1.bf16.msra.mxu0 0
    %521 = vmatprep.subr.bf16.mxu0 0
    %522 = vmatpush1.bf16.msra.mxu0 0
    %523 = vmatprep.subr.bf16.mxu0 0
    %524 = vmatpush1.bf16.msra.mxu0 0
    %525 = vmatprep.subr.bf16.mxu0 0
    %526 = vmatpush1.bf16.msra.mxu0 0
    %527 = vmatprep.subr.bf16.mxu0 0
    %528 = vmatpush1.bf16.msra.mxu0 0
    %529 = vmatprep.subr.bf16.mxu0 0
    %530 = vmatpush1.bf16.msra.mxu0 0
    %531 = vmatprep.subr.bf16.mxu0 0
    %532 = vmatpush1.bf16.msra.mxu0 0
    %533 = vmatprep.subr.bf16.mxu0 0
    %534 = vmatpush1.bf16.msra.mxu0 0
    %535 = vmatprep.subr.bf16.mxu0 0
    %536 = vmatpush1.bf16.msra.mxu0 0
    %537 = vmatprep.mubr.bf16.mxu0 0
    %538 = vmatmul.mubr.bf16.gmra.mrb[0].mxu0 %v458
    %v539 = vpop.f32.mrb[0].mxu0
    %v540 = vadd.f32 0.0, %v539
    %v541 = vpop.f32.mrb[0].mxu0
    %v542 = vpop.f32.mrb[0].mxu0
    %v543 = vadd.f32 0.0, %v542
    %v544 = vpop.f32.mrb[0].mxu0
    %545 = vmatprep.mubr.bf16.mxu0 0
    %546 = vmatmul.mubr.bf16.gmra.mrb[0].mxu0 %v461
    %v547 = vpop.f32.mrb[0].mxu0
    %v548 = vadd.f32 0.0, %v547
    %v549 = vpop.f32.mrb[0].mxu0
    %v550 = vpop.f32.mrb[0].mxu0
    %v551 = vadd.f32 0.0, %v550
    %v552 = vpop.f32.mrb[0].mxu0
    %553 = vmatprep.mubr.bf16.mxu0 0
    %554 = vmatmul.mubr.bf16.gmra.mrb[0].mxu0 %v464
    %v555 = vpop.f32.mrb[0].mxu0
    %v556 = vadd.f32 0.0, %v555
    %v557 = vpop.f32.mrb[0].mxu0
    %v558 = vpop.f32.mrb[0].mxu0
    %v559 = vadd.f32 0.0, %v558
    %v560 = vpop.f32.mrb[0].mxu0
    %561 = vmatprep.mubr.bf16.mxu0 0
    %562 = vmatmul.mubr.bf16.gmra.mrb[0].mxu0 %v467
    %v563 = vpop.f32.mrb[0].mxu0
    %v564 = vadd.f32 0.0, %v563
    %v565 = vpop.f32.mrb[0].mxu0
    %v566 = vpop.f32.mrb[0].mxu0
    %v567 = vadd.f32 0.0, %v566
    %v568 = vpop.f32.mrb[0].mxu0
    %569 = vmatprep.mubr.bf16.mxu0 0
    %570 = vmatmul.mubr.bf16.gmra.mrb[0].mxu0 %v470
    %v571 = vpop.f32.mrb[0].mxu0
    %v572 = vadd.f32 0.0, %v571
    %v573 = vpop.f32.mrb[0].mxu0
    %v574 = vpop.f32.mrb[0].mxu0
    %v575 = vadd.f32 0.0, %v574
    %v576 = vpop.f32.mrb[0].mxu0
    %577 = vmatprep.mubr.bf16.mxu0 0
    %578 = vmatmul.mubr.bf16.gmra.mrb[0].mxu0 %v473
    %v579 = vpop.f32.mrb[0].mxu0
    %v580 = vadd.f32 0.0, %v579
    %v581 = vpop.f32.mrb[0].mxu0
    %v582 = vpop.f32.mrb[0].mxu0
    %v583 = vadd.f32 0.0, %v582
    %v584 = vpop.f32.mrb[0].mxu0
    %585 = vmatprep.mubr.bf16.mxu0 0
    %586 = vmatmul.mubr.bf16.gmra.mrb[0].mxu0 %v476
    %v587 = vpop.f32.mrb[0].mxu0
    %v588 = vadd.f32 0.0, %v587
    %v589 = vpop.f32.mrb[0].mxu0
    %v590 = vpop.f32.mrb[0].mxu0
    %v591 = vadd.f32 0.0, %v590
    %v592 = vpop.f32.mrb[0].mxu0
    %593 = vmatprep.mubr.bf16.mxu0 0
    %594 = vmatmul.mubr.bf16.gmra.mrb[0].mxu0 %v479
    %v595 = vpop.f32.mrb[0].mxu0
    %v596 = vadd.f32 0.0, %v595
    %v597 = vpop.f32.mrb[0].mxu0
    %v598 = vpop.f32.mrb[0].mxu0
    %v599 = vadd.f32 0.0, %v598
    %v600 = vpop.f32.mrb[0].mxu0
    %601 = vmatprep.mubr.bf16.mxu0 0
    %602 = vmatmul.mubr.bf16.gmra.mrb[0].mxu0 %v482
    %v603 = vpop.f32.mrb[0].mxu0
    %v604 = vadd.f32 0.0, %v603
    %v605 = vpop.f32.mrb[0].mxu0
    %v606 = vpop.f32.mrb[0].mxu0
    %v607 = vadd.f32 0.0, %v606
    %v608 = vpop.f32.mrb[0].mxu0
    %609 = vmatprep.mubr.bf16.mxu0 0
    %610 = vmatmul.mubr.bf16.gmra.mrb[0].mxu0 %v485
    %v611 = vpop.f32.mrb[0].mxu0
    %v612 = vadd.f32 0.0, %v611
    %v613 = vpop.f32.mrb[0].mxu0
    %v614 = vpop.f32.mrb[0].mxu0
    %v615 = vadd.f32 0.0, %v614
    %v616 = vpop.f32.mrb[0].mxu0
    %617 = vmatprep.mubr.bf16.mxu0 0
    %618 = vmatmul.mubr.bf16.gmra.mrb[0].mxu0 %v488
    %v619 = vpop.f32.mrb[0].mxu0
    %v620 = vadd.f32 0.0, %v619
    %v621 = vpop.f32.mrb[0].mxu0
    %v622 = vpop.f32.mrb[0].mxu0
    %v623 = vadd.f32 0.0, %v622
    %v624 = vpop.f32.mrb[0].mxu0
    %625 = vmatprep.mubr.bf16.mxu0 0
    %626 = vmatmul.mubr.bf16.gmra.mrb[0].mxu0 %v491
    %v627 = vpop.f32.mrb[0].mxu0
    %v628 = vadd.f32 0.0, %v627
    %v629 = vpop.f32.mrb[0].mxu0
    %v630 = vpop.f32.mrb[0].mxu0
    %v631 = vadd.f32 0.0, %v630
    %v632 = vpop.f32.mrb[0].mxu0
    %633 = vmatprep.mubr.bf16.mxu0 0
    %634 = vmatmul.mubr.bf16.gmra.mrb[0].mxu0 %v494
    %v635 = vpop.f32.mrb[0].mxu0
    %v636 = vadd.f32 0.0, %v635
    %v637 = vpop.f32.mrb[0].mxu0
    %v638 = vpop.f32.mrb[0].mxu0
    %v639 = vadd.f32 0.0, %v638
    %v640 = vpop.f32.mrb[0].mxu0
    %641 = vmatprep.mubr.bf16.mxu0 0
    %642 = vmatmul.mubr.bf16.gmra.mrb[0].mxu0 %v497
    %v643 = vpop.f32.mrb[0].mxu0
    %v644 = vadd.f32 0.0, %v643
    %v645 = vpop.f32.mrb[0].mxu0
    %v646 = vpop.f32.mrb[0].mxu0
    %v647 = vadd.f32 0.0, %v646
    %v648 = vpop.f32.mrb[0].mxu0
    %649 = vmatprep.mubr.bf16.mxu0 0
    %650 = vmatmul.mubr.bf16.gmra.mrb[0].mxu0 %v500
    %v651 = vpop.f32.mrb[0].mxu0
    %v652 = vadd.f32 0.0, %v651
    %v653 = vpop.f32.mrb[0].mxu0
    %v654 = vpop.f32.mrb[0].mxu0
    %v655 = vadd.f32 0.0, %v654
    %v656 = vpop.f32.mrb[0].mxu0
    %657 = vmatprep.mubr.bf16.mxu0 0
    %658 = vmatmul.mubr.bf16.gmra.mrb[0].mxu0 %v503
    %v659 = vpop.f32.mrb[0].mxu0
    %v660 = vadd.f32 0.0, %v659
    %v661 = vpop.f32.mrb[0].mxu0
    %v662 = vpop.f32.mrb[0].mxu0
    %v663 = vadd.f32 0.0, %v662
    %v664 = vpop.f32.mrb[0].mxu0
    %665 = vdwg.mxu0
    %v698 = vunpack.c.l.b16 %v22
    %v699 = vunpack.c.l.b16 %v23
    %v700 = vunpack.c.l.b16 %v24
    %v701 = vunpack.c.l.b16 %v25
    %v702 = vunpack.c.l.b16 %v26
    %v703 = vunpack.c.l.b16 %v27
    %v704 = vunpack.c.l.b16 %v28
    %v705 = vunpack.c.l.b16 %v29
    %v706 = vunpack.c.l.b16 %v31
    %v707 = vunpack.c.l.b16 %v32
    %v708 = vunpack.c.l.b16 %v33
    %v709 = vunpack.c.l.b16 %v34
    %v710 = vunpack.c.l.b16 %v35
    %v711 = vunpack.c.l.b16 %v36
    %v712 = vunpack.c.l.b16 %v37
    %v713 = vunpack.c.l.b16 %v38
    %v714 = vunpack.c.l.b16 %v40
    %v715 = vunpack.c.l.b16 %v41
    %v716 = vunpack.c.l.b16 %v42
    %v717 = vunpack.c.l.b16 %v43
    %v718 = vunpack.c.l.b16 %v44
    %v719 = vunpack.c.l.b16 %v45
    %v720 = vunpack.c.l.b16 %v46
    %v721 = vunpack.c.l.b16 %v47
    %v722 = vunpack.c.l.b16 %v49
    %v723 = vunpack.c.l.b16 %v50
    %v724 = vunpack.c.l.b16 %v51
    %v725 = vunpack.c.l.b16 %v52
    %v726 = vunpack.c.l.b16 %v53
    %v727 = vunpack.c.l.b16 %v54
    %v728 = vunpack.c.l.b16 %v55
    %v729 = vunpack.c.l.b16 %v56
    %v730 = vpack.c.b16 %v699, %v698
    %v731 = vpack.c.b16 %v701, %v700
    %v732 = vpack.c.b16 %v703, %v702
    %v733 = vpack.c.b16 %v705, %v704
    %v734 = vpack.c.b16 %v707, %v706
    %v735 = vpack.c.b16 %v709, %v708
    %v736 = vpack.c.b16 %v711, %v710
    %v737 = vpack.c.b16 %v713, %v712
    %v738 = vpack.c.b16 %v715, %v714
    %v739 = vpack.c.b16 %v717, %v716
    %v740 = vpack.c.b16 %v719, %v718
    %v741 = vpack.c.b16 %v721, %v720
    %v742 = vpack.c.b16 %v723, %v722
    %v743 = vpack.c.b16 %v725, %v724
    %v744 = vpack.c.b16 %v727, %v726
    %v745 = vpack.c.b16 %v729, %v728
    %v748 = vunpack.c.l.b16 %v58
    %v749 = vunpack.c.l.b16 %v59
    %v750 = vpack.c.b16 %v749, %v748
    %v753 = vsel %vm456, %v730, 0
    %v756 = vsel %vm456, %v731, 0
    %v759 = vsel %vm456, %v732, 0
    %v762 = vsel %vm456, %v733, 0
    %v765 = vsel %vm456, %v734, 0
    %v768 = vsel %vm456, %v735, 0
    %v771 = vsel %vm456, %v736, 0
    %v774 = vsel %vm456, %v737, 0
    %v777 = vsel %vm456, %v738, 0
    %v780 = vsel %vm456, %v739, 0
    %v783 = vsel %vm456, %v740, 0
    %v786 = vsel %vm456, %v741, 0
    %v789 = vsel %vm456, %v742, 0
    %v792 = vsel %vm456, %v743, 0
    %v795 = vsel %vm456, %v744, 0
    %v798 = vsel %vm456, %v745, 0
    %800 = vmatprep.subr.bf16.mxu0 0
    %801 = vmatpush1.bf16.msra.mxu0 %v750
    %802 = vmatprep.subr.bf16.mxu0 0
    %803 = vmatpush1.bf16.msra.mxu0 0
    %804 = vmatprep.subr.bf16.mxu0 0
    %805 = vmatpush1.bf16.msra.mxu0 0
    %806 = vmatprep.subr.bf16.mxu0 0
    %807 = vmatpush1.bf16.msra.mxu0 0
    %808 = vmatprep.subr.bf16.mxu0 0
    %809 = vmatpush1.bf16.msra.mxu0 0
    %810 = vmatprep.subr.bf16.mxu0 0
    %811 = vmatpush1.bf16.msra.mxu0 0
    %812 = vmatprep.subr.bf16.mxu0 0
    %813 = vmatpush1.bf16.msra.mxu0 0
    %814 = vmatprep.subr.bf16.mxu0 0
    %815 = vmatpush1.bf16.msra.mxu0 0
    %816 = vmatprep.subr.bf16.mxu0 0
    %817 = vmatpush1.bf16.msra.mxu0 0
    %818 = vmatprep.subr.bf16.mxu0 0
    %819 = vmatpush1.bf16.msra.mxu0 0
    %820 = vmatprep.subr.bf16.mxu0 0
    %821 = vmatpush1.bf16.msra.mxu0 0
    %822 = vmatprep.subr.bf16.mxu0 0
    %823 = vmatpush1.bf16.msra.mxu0 0
    %824 = vmatprep.subr.bf16.mxu0 0
    %825 = vmatpush1.bf16.msra.mxu0 0
    %826 = vmatprep.subr.bf16.mxu0 0
    %827 = vmatpush1.bf16.msra.mxu0 0
    %828 = vmatprep.subr.bf16.mxu0 0
    %829 = vmatpush1.bf16.msra.mxu0 0
    %830 = vmatprep.subr.bf16.mxu0 0
    %831 = vmatpush1.bf16.msra.mxu0 0
    %832 = vmatprep.mubr.bf16.mxu0 0
    %833 = vmatmul.mubr.bf16.gmra.mrb[0].mxu0 %v753
    %v834 = vpop.f32.mrb[0].mxu0
    %v835 = vadd.f32 %v540, %v834
    %v836 = vpop.f32.mrb[0].mxu0
    %v837 = vpop.f32.mrb[0].mxu0
    %v838 = vadd.f32 %v543, %v837
    %v839 = vpop.f32.mrb[0].mxu0
    %840 = vmatprep.mubr.bf16.mxu0 0
    %841 = vmatmul.mubr.bf16.gmra.mrb[0].mxu0 %v756
    %v842 = vpop.f32.mrb[0].mxu0
    %v843 = vadd.f32 %v548, %v842
    %v844 = vpop.f32.mrb[0].mxu0
    %v845 = vpop.f32.mrb[0].mxu0
    %v846 = vadd.f32 %v551, %v845
    %v847 = vpop.f32.mrb[0].mxu0
    %848 = vmatprep.mubr.bf16.mxu0 0
    %849 = vmatmul.mubr.bf16.gmra.mrb[0].mxu0 %v759
    %v850 = vpop.f32.mrb[0].mxu0
    %v851 = vadd.f32 %v556, %v850
    %v852 = vpop.f32.mrb[0].mxu0
    %v853 = vpop.f32.mrb[0].mxu0
    %v854 = vadd.f32 %v559, %v853
    %v855 = vpop.f32.mrb[0].mxu0
    %856 = vmatprep.mubr.bf16.mxu0 0
    %857 = vmatmul.mubr.bf16.gmra.mrb[0].mxu0 %v762
    %v858 = vpop.f32.mrb[0].mxu0
    %v859 = vadd.f32 %v564, %v858
    %v860 = vpop.f32.mrb[0].mxu0
    %v861 = vpop.f32.mrb[0].mxu0
    %v862 = vadd.f32 %v567, %v861
    %v863 = vpop.f32.mrb[0].mxu0
    %864 = vmatprep.mubr.bf16.mxu0 0
    %865 = vmatmul.mubr.bf16.gmra.mrb[0].mxu0 %v765
    %v866 = vpop.f32.mrb[0].mxu0
    %v867 = vadd.f32 %v572, %v866
    %v868 = vpop.f32.mrb[0].mxu0
    %v869 = vpop.f32.mrb[0].mxu0
    %v870 = vadd.f32 %v575, %v869
    %v871 = vpop.f32.mrb[0].mxu0
    %872 = vmatprep.mubr.bf16.mxu0 0
    %873 = vmatmul.mubr.bf16.gmra.mrb[0].mxu0 %v768
    %v874 = vpop.f32.mrb[0].mxu0
    %v875 = vadd.f32 %v580, %v874
    %v876 = vpop.f32.mrb[0].mxu0
    %v877 = vpop.f32.mrb[0].mxu0
    %v878 = vadd.f32 %v583, %v877
    %v879 = vpop.f32.mrb[0].mxu0
    %880 = vmatprep.mubr.bf16.mxu0 0
    %881 = vmatmul.mubr.bf16.gmra.mrb[0].mxu0 %v771
    %v882 = vpop.f32.mrb[0].mxu0
    %v883 = vadd.f32 %v588, %v882
    %v884 = vpop.f32.mrb[0].mxu0
    %v885 = vpop.f32.mrb[0].mxu0
    %v886 = vadd.f32 %v591, %v885
    %v887 = vpop.f32.mrb[0].mxu0
    %888 = vmatprep.mubr.bf16.mxu0 0
    %889 = vmatmul.mubr.bf16.gmra.mrb[0].mxu0 %v774
    %v890 = vpop.f32.mrb[0].mxu0
    %v891 = vadd.f32 %v596, %v890
    %v892 = vpop.f32.mrb[0].mxu0
    %v893 = vpop.f32.mrb[0].mxu0
    %v894 = vadd.f32 %v599, %v893
    %v895 = vpop.f32.mrb[0].mxu0
    %896 = vmatprep.mubr.bf16.mxu0 0
    %897 = vmatmul.mubr.bf16.gmra.mrb[0].mxu0 %v777
    %v898 = vpop.f32.mrb[0].mxu0
    %v899 = vadd.f32 %v604, %v898
    %v900 = vpop.f32.mrb[0].mxu0
    %v901 = vpop.f32.mrb[0].mxu0
    %v902 = vadd.f32 %v607, %v901
    %v903 = vpop.f32.mrb[0].mxu0
    %904 = vmatprep.mubr.bf16.mxu0 0
    %905 = vmatmul.mubr.bf16.gmra.mrb[0].mxu0 %v780
    %v906 = vpop.f32.mrb[0].mxu0
    %v907 = vadd.f32 %v612, %v906
    %v908 = vpop.f32.mrb[0].mxu0
    %v909 = vpop.f32.mrb[0].mxu0
    %v910 = vadd.f32 %v615, %v909
    %v911 = vpop.f32.mrb[0].mxu0
    %912 = vmatprep.mubr.bf16.mxu0 0
    %913 = vmatmul.mubr.bf16.gmra.mrb[0].mxu0 %v783
    %v914 = vpop.f32.mrb[0].mxu0
    %v915 = vadd.f32 %v620, %v914
    %v916 = vpop.f32.mrb[0].mxu0
    %v917 = vpop.f32.mrb[0].mxu0
    %v918 = vadd.f32 %v623, %v917
    %v919 = vpop.f32.mrb[0].mxu0
    %920 = vmatprep.mubr.bf16.mxu0 0
    %921 = vmatmul.mubr.bf16.gmra.mrb[0].mxu0 %v786
    %v922 = vpop.f32.mrb[0].mxu0
    %v923 = vadd.f32 %v628, %v922
    %v924 = vpop.f32.mrb[0].mxu0
    %v925 = vpop.f32.mrb[0].mxu0
    %v926 = vadd.f32 %v631, %v925
    %v927 = vpop.f32.mrb[0].mxu0
    %928 = vmatprep.mubr.bf16.mxu0 0
    %929 = vmatmul.mubr.bf16.gmra.mrb[0].mxu0 %v789
    %v930 = vpop.f32.mrb[0].mxu0
    %v931 = vadd.f32 %v636, %v930
    %v932 = vpop.f32.mrb[0].mxu0
    %v933 = vpop.f32.mrb[0].mxu0
    %v934 = vadd.f32 %v639, %v933
    %v935 = vpop.f32.mrb[0].mxu0
    %936 = vmatprep.mubr.bf16.mxu0 0
    %937 = vmatmul.mubr.bf16.gmra.mrb[0].mxu0 %v792
    %v938 = vpop.f32.mrb[0].mxu0
    %v939 = vadd.f32 %v644, %v938
    %v940 = vpop.f32.mrb[0].mxu0
    %v941 = vpop.f32.mrb[0].mxu0
    %v942 = vadd.f32 %v647, %v941
    %v943 = vpop.f32.mrb[0].mxu0
    %944 = vmatprep.mubr.bf16.mxu0 0
    %945 = vmatmul.mubr.bf16.gmra.mrb[0].mxu0 %v795
    %v946 = vpop.f32.mrb[0].mxu0
    %v947 = vadd.f32 %v652, %v946
    %v948 = vpop.f32.mrb[0].mxu0
    %v949 = vpop.f32.mrb[0].mxu0
    %v950 = vadd.f32 %v655, %v949
    %v951 = vpop.f32.mrb[0].mxu0
    %952 = vmatprep.mubr.bf16.mxu0 0
    %953 = vmatmul.mubr.bf16.gmra.mrb[0].mxu0 %v798
    %v954 = vpop.f32.mrb[0].mxu0
    %v955 = vadd.f32 %v660, %v954
    %v956 = vpop.f32.mrb[0].mxu0
    %v957 = vpop.f32.mrb[0].mxu0
    %v958 = vadd.f32 %v663, %v957
    %v959 = vpop.f32.mrb[0].mxu0
    %960 = vdwg.mxu0
    %vm965 = vcmask 1042432
    %vm966 = vcmask 1046532
    %vm967 = vmor %vm965, %vm966
    %v968 = vrot.slane %v22, 5
    %v969 = vrot.slane %v968, 4
    %v970 = vrot.slane %v23, 5
    %v971 = vsel %vm967, %v969, %v970
    %v972 = vrot.slane %v970, 4
    %v973 = vrot.slane %v24, 5
    %v974 = vsel %vm967, %v972, %v973
    %v975 = vrot.slane %v973, 4
    %v976 = vrot.slane %v25, 5
    %v977 = vsel %vm967, %v975, %v976
    %v978 = vrot.slane %v976, 4
    %v979 = vrot.slane %v26, 5
    %v980 = vsel %vm967, %v978, %v979
    %v981 = vrot.slane %v979, 4
    %v982 = vrot.slane %v27, 5
    %v983 = vsel %vm967, %v981, %v982
    %v984 = vrot.slane %v982, 4
    %v985 = vrot.slane %v28, 5
    %v986 = vsel %vm967, %v984, %v985
    %v987 = vrot.slane %v985, 4
    %v988 = vrot.slane %v29, 5
    %v989 = vsel %vm967, %v987, %v988
    %v990 = vrot.slane %v988, 4
    %v991 = vrot.slane %v30, 5
    %v992 = vsel %vm967, %v990, %v991
    %v993 = vrot.slane %v31, 5
    %v994 = vrot.slane %v993, 4
    %v995 = vrot.slane %v32, 5
    %v996 = vsel %vm967, %v994, %v995
    %v997 = vrot.slane %v995, 4
    %v998 = vrot.slane %v33, 5
    %v999 = vsel %vm967, %v997, %v998
    %v1000 = vrot.slane %v998, 4
    %v1001 = vrot.slane %v34, 5
    %v1002 = vsel %vm967, %v1000, %v1001
    %v1003 = vrot.slane %v1001, 4
    %v1004 = vrot.slane %v35, 5
    %v1005 = vsel %vm967, %v1003, %v1004
    %v1006 = vrot.slane %v1004, 4
    %v1007 = vrot.slane %v36, 5
    %v1008 = vsel %vm967, %v1006, %v1007
    %v1009 = vrot.slane %v1007, 4
    %v1010 = vrot.slane %v37, 5
    %v1011 = vsel %vm967, %v1009, %v1010
    %v1012 = vrot.slane %v1010, 4
    %v1013 = vrot.slane %v38, 5
    %v1014 = vsel %vm967, %v1012, %v1013
    %v1015 = vrot.slane %v1013, 4
    %v1016 = vrot.slane %v39, 5
    %v1017 = vsel %vm967, %v1015, %v1016
    %v1018 = vrot.slane %v40, 5
    %v1019 = vrot.slane %v1018, 4
    %v1020 = vrot.slane %v41, 5
    %v1021 = vsel %vm967, %v1019, %v1020
    %v1022 = vrot.slane %v1020, 4
    %v1023 = vrot.slane %v42, 5
    %v1024 = vsel %vm967, %v1022, %v1023
    %v1025 = vrot.slane %v1023, 4
    %v1026 = vrot.slane %v43, 5
    %v1027 = vsel %vm967, %v1025, %v1026
    %v1028 = vrot.slane %v1026, 4
    %v1029 = vrot.slane %v44, 5
    %v1030 = vsel %vm967, %v1028, %v1029
    %v1031 = vrot.slane %v1029, 4
    %v1032 = vrot.slane %v45, 5
    %v1033 = vsel %vm967, %v1031, %v1032
    %v1034 = vrot.slane %v1032, 4
    %v1035 = vrot.slane %v46, 5
    %v1036 = vsel %vm967, %v1034, %v1035
    %v1037 = vrot.slane %v1035, 4
    %v1038 = vrot.slane %v47, 5
    %v1039 = vsel %vm967, %v1037, %v1038
    %v1040 = vrot.slane %v1038, 4
    %v1041 = vrot.slane %v48, 5
    %v1042 = vsel %vm967, %v1040, %v1041
    %v1043 = vrot.slane %v49, 5
    %v1044 = vrot.slane %v1043, 4
    %v1045 = vrot.slane %v50, 5
    %v1046 = vsel %vm967, %v1044, %v1045
    %v1047 = vrot.slane %v1045, 4
    %v1048 = vrot.slane %v51, 5
    %v1049 = vsel %vm967, %v1047, %v1048
    %v1050 = vrot.slane %v1048, 4
    %v1051 = vrot.slane %v52, 5
    %v1052 = vsel %vm967, %v1050, %v1051
    %v1053 = vrot.slane %v1051, 4
    %v1054 = vrot.slane %v53, 5
    %v1055 = vsel %vm967, %v1053, %v1054
    %v1056 = vrot.slane %v1054, 4
    %v1057 = vrot.slane %v54, 5
    %v1058 = vsel %vm967, %v1056, %v1057
    %v1059 = vrot.slane %v1057, 4
    %v1060 = vrot.slane %v55, 5
    %v1061 = vsel %vm967, %v1059, %v1060
    %v1062 = vrot.slane %v1060, 4
    %v1063 = vrot.slane %v56, 5
    %v1064 = vsel %vm967, %v1062, %v1063
    %v1065 = vrot.slane %v1063, 4
    %v1066 = vrot.slane %v57, 5
    %v1067 = vsel %vm967, %v1065, %v1066
    %s1068 = scalar_lea.vmem %s1, 16
    %v1069 = vld [vmem:[%s1068] sm:$0xf]
    %v1070 = vld [vmem:[%s1068 + $0x4] sm:$0xf]
    %v1071 = vunpack.c.l.b16 %v971
    %v1072 = vunpack.c.l.b16 %v974
    %v1073 = vunpack.c.l.b16 %v977
    %v1074 = vunpack.c.l.b16 %v980
    %v1075 = vunpack.c.l.b16 %v983
    %v1076 = vunpack.c.l.b16 %v986
    %v1077 = vunpack.c.l.b16 %v989
    %v1078 = vunpack.c.l.b16 %v992
    %v1079 = vunpack.c.l.b16 %v996
    %v1080 = vunpack.c.l.b16 %v999
    %v1081 = vunpack.c.l.b16 %v1002
    %v1082 = vunpack.c.l.b16 %v1005
    %v1083 = vunpack.c.l.b16 %v1008
    %v1084 = vunpack.c.l.b16 %v1011
    %v1085 = vunpack.c.l.b16 %v1014
    %v1086 = vunpack.c.l.b16 %v1017
    %v1087 = vunpack.c.l.b16 %v1021
    %v1088 = vunpack.c.l.b16 %v1024
    %v1089 = vunpack.c.l.b16 %v1027
    %v1090 = vunpack.c.l.b16 %v1030
    %v1091 = vunpack.c.l.b16 %v1033
    %v1092 = vunpack.c.l.b16 %v1036
    %v1093 = vunpack.c.l.b16 %v1039
    %v1094 = vunpack.c.l.b16 %v1042
    %v1095 = vunpack.c.l.b16 %v1046
    %v1096 = vunpack.c.l.b16 %v1049
    %v1097 = vunpack.c.l.b16 %v1052
    %v1098 = vunpack.c.l.b16 %v1055
    %v1099 = vunpack.c.l.b16 %v1058
    %v1100 = vunpack.c.l.b16 %v1061
    %v1101 = vunpack.c.l.b16 %v1064
    %v1102 = vunpack.c.l.b16 %v1067
    %v1103 = vpack.c.b16 %v1072, %v1071
    %v1104 = vpack.c.b16 %v1074, %v1073
    %v1105 = vpack.c.b16 %v1076, %v1075
    %v1106 = vpack.c.b16 %v1078, %v1077
    %v1107 = vpack.c.b16 %v1080, %v1079
    %v1108 = vpack.c.b16 %v1082, %v1081
    %v1109 = vpack.c.b16 %v1084, %v1083
    %v1110 = vpack.c.b16 %v1086, %v1085
    %v1111 = vpack.c.b16 %v1088, %v1087
    %v1112 = vpack.c.b16 %v1090, %v1089
    %v1113 = vpack.c.b16 %v1092, %v1091
    %v1114 = vpack.c.b16 %v1094, %v1093
    %v1115 = vpack.c.b16 %v1096, %v1095
    %v1116 = vpack.c.b16 %v1098, %v1097
    %v1117 = vpack.c.b16 %v1100, %v1099
    %v1118 = vpack.c.b16 %v1102, %v1101
    %v1121 = vunpack.c.l.b16 %v1069
    %v1122 = vunpack.c.l.b16 %v1070
    %v1123 = vpack.c.b16 %v1122, %v1121
    %v1126 = vsel %vm456, %v1103, 0
    %v1129 = vsel %vm456, %v1104, 0
    %v1132 = vsel %vm456, %v1105, 0
    %v1135 = vsel %vm456, %v1106, 0
    %v1138 = vsel %vm456, %v1107, 0
    %v1141 = vsel %vm456, %v1108, 0
    %v1144 = vsel %vm456, %v1109, 0
    %v1147 = vsel %vm456, %v1110, 0
    %v1150 = vsel %vm456, %v1111, 0
    %v1153 = vsel %vm456, %v1112, 0
    %v1156 = vsel %vm456, %v1113, 0
    %v1159 = vsel %vm456, %v1114, 0
    %v1162 = vsel %vm456, %v1115, 0
    %v1165 = vsel %vm456, %v1116, 0
    %v1168 = vsel %vm456, %v1117, 0
    %v1171 = vsel %vm456, %v1118, 0
    %1173 = vmatprep.subr.bf16.mxu0 0
    %1174 = vmatpush1.bf16.msra.mxu0 %v1123
    %1175 = vmatprep.subr.bf16.mxu0 0
    %1176 = vmatpush1.bf16.msra.mxu0 0
    %1177 = vmatprep.subr.bf16.mxu0 0
    %1178 = vmatpush1.bf16.msra.mxu0 0
    %1179 = vmatprep.subr.bf16.mxu0 0
    %1180 = vmatpush1.bf16.msra.mxu0 0
    %1181 = vmatprep.subr.bf16.mxu0 0
    %1182 = vmatpush1.bf16.msra.mxu0 0
    %1183 = vmatprep.subr.bf16.mxu0 0
    %1184 = vmatpush1.bf16.msra.mxu0 0
    %1185 = vmatprep.subr.bf16.mxu0 0
    %1186 = vmatpush1.bf16.msra.mxu0 0
    %1187 = vmatprep.subr.bf16.mxu0 0
    %1188 = vmatpush1.bf16.msra.mxu0 0
    %1189 = vmatprep.subr.bf16.mxu0 0
    %1190 = vmatpush1.bf16.msra.mxu0 0
    %1191 = vmatprep.subr.bf16.mxu0 0
    %1192 = vmatpush1.bf16.msra.mxu0 0
    %1193 = vmatprep.subr.bf16.mxu0 0
    %1194 = vmatpush1.bf16.msra.mxu0 0
    %1195 = vmatprep.subr.bf16.mxu0 0
    %1196 = vmatpush1.bf16.msra.mxu0 0
    %1197 = vmatprep.subr.bf16.mxu0 0
    %1198 = vmatpush1.bf16.msra.mxu0 0
    %1199 = vmatprep.subr.bf16.mxu0 0
    %1200 = vmatpush1.bf16.msra.mxu0 0
    %1201 = vmatprep.subr.bf16.mxu0 0
    %1202 = vmatpush1.bf16.msra.mxu0 0
    %1203 = vmatprep.subr.bf16.mxu0 0
    %1204 = vmatpush1.bf16.msra.mxu0 0
    %1205 = vmatprep.mubr.bf16.mxu0 0
    %1206 = vmatmul.mubr.bf16.gmra.mrb[0].mxu0 %v1126
    %v1207 = vpop.f32.mrb[0].mxu0
    %v1208 = vadd.f32 0.0, %v1207
    %v1209 = vpop.f32.mrb[0].mxu0
    %v1210 = vpop.f32.mrb[0].mxu0
    %v1211 = vadd.f32 0.0, %v1210
    %v1212 = vpop.f32.mrb[0].mxu0
    %1213 = vmatprep.mubr.bf16.mxu0 0
    %1214 = vmatmul.mubr.bf16.gmra.mrb[0].mxu0 %v1129
    %v1215 = vpop.f32.mrb[0].mxu0
    %v1216 = vadd.f32 0.0, %v1215
    %v1217 = vpop.f32.mrb[0].mxu0
    %v1218 = vpop.f32.mrb[0].mxu0
    %v1219 = vadd.f32 0.0, %v1218
    %v1220 = vpop.f32.mrb[0].mxu0
    %1221 = vmatprep.mubr.bf16.mxu0 0
    %1222 = vmatmul.mubr.bf16.gmra.mrb[0].mxu0 %v1132
    %v1223 = vpop.f32.mrb[0].mxu0
    %v1224 = vadd.f32 0.0, %v1223
    %v1225 = vpop.f32.mrb[0].mxu0
    %v1226 = vpop.f32.mrb[0].mxu0
    %v1227 = vadd.f32 0.0, %v1226
    %v1228 = vpop.f32.mrb[0].mxu0
    %1229 = vmatprep.mubr.bf16.mxu0 0
    %1230 = vmatmul.mubr.bf16.gmra.mrb[0].mxu0 %v1135
    %v1231 = vpop.f32.mrb[0].mxu0
    %v1232 = vadd.f32 0.0, %v1231
    %v1233 = vpop.f32.mrb[0].mxu0
    %v1234 = vpop.f32.mrb[0].mxu0
    %v1235 = vadd.f32 0.0, %v1234
    %v1236 = vpop.f32.mrb[0].mxu0
    %1237 = vmatprep.mubr.bf16.mxu0 0
    %1238 = vmatmul.mubr.bf16.gmra.mrb[0].mxu0 %v1138
    %v1239 = vpop.f32.mrb[0].mxu0
    %v1240 = vadd.f32 0.0, %v1239
    %v1241 = vpop.f32.mrb[0].mxu0
    %v1242 = vpop.f32.mrb[0].mxu0
    %v1243 = vadd.f32 0.0, %v1242
    %v1244 = vpop.f32.mrb[0].mxu0
    %1245 = vmatprep.mubr.bf16.mxu0 0
    %1246 = vmatmul.mubr.bf16.gmra.mrb[0].mxu0 %v1141
    %v1247 = vpop.f32.mrb[0].mxu0
    %v1248 = vadd.f32 0.0, %v1247
    %v1249 = vpop.f32.mrb[0].mxu0
    %v1250 = vpop.f32.mrb[0].mxu0
    %v1251 = vadd.f32 0.0, %v1250
    %v1252 = vpop.f32.mrb[0].mxu0
    %1253 = vmatprep.mubr.bf16.mxu0 0
    %1254 = vmatmul.mubr.bf16.gmra.mrb[0].mxu0 %v1144
    %v1255 = vpop.f32.mrb[0].mxu0
    %v1256 = vadd.f32 0.0, %v1255
    %v1257 = vpop.f32.mrb[0].mxu0
    %v1258 = vpop.f32.mrb[0].mxu0
    %v1259 = vadd.f32 0.0, %v1258
    %v1260 = vpop.f32.mrb[0].mxu0
    %1261 = vmatprep.mubr.bf16.mxu0 0
    %1262 = vmatmul.mubr.bf16.gmra.mrb[0].mxu0 %v1147
    %v1263 = vpop.f32.mrb[0].mxu0
    %v1264 = vadd.f32 0.0, %v1263
    %v1265 = vpop.f32.mrb[0].mxu0
    %v1266 = vpop.f32.mrb[0].mxu0
    %v1267 = vadd.f32 0.0, %v1266
    %v1268 = vpop.f32.mrb[0].mxu0
    %1269 = vmatprep.mubr.bf16.mxu0 0
    %1270 = vmatmul.mubr.bf16.gmra.mrb[0].mxu0 %v1150
    %v1271 = vpop.f32.mrb[0].mxu0
    %v1272 = vadd.f32 0.0, %v1271
    %v1273 = vpop.f32.mrb[0].mxu0
    %v1274 = vpop.f32.mrb[0].mxu0
    %v1275 = vadd.f32 0.0, %v1274
    %v1276 = vpop.f32.mrb[0].mxu0
    %1277 = vmatprep.mubr.bf16.mxu0 0
    %1278 = vmatmul.mubr.bf16.gmra.mrb[0].mxu0 %v1153
    %v1279 = vpop.f32.mrb[0].mxu0
    %v1280 = vadd.f32 0.0, %v1279
    %v1281 = vpop.f32.mrb[0].mxu0
    %v1282 = vpop.f32.mrb[0].mxu0
    %v1283 = vadd.f32 0.0, %v1282
    %v1284 = vpop.f32.mrb[0].mxu0
    %1285 = vmatprep.mubr.bf16.mxu0 0
    %1286 = vmatmul.mubr.bf16.gmra.mrb[0].mxu0 %v1156
    %v1287 = vpop.f32.mrb[0].mxu0
    %v1288 = vadd.f32 0.0, %v1287
    %v1289 = vpop.f32.mrb[0].mxu0
    %v1290 = vpop.f32.mrb[0].mxu0
    %v1291 = vadd.f32 0.0, %v1290
    %v1292 = vpop.f32.mrb[0].mxu0
    %1293 = vmatprep.mubr.bf16.mxu0 0
    %1294 = vmatmul.mubr.bf16.gmra.mrb[0].mxu0 %v1159
    %v1295 = vpop.f32.mrb[0].mxu0
    %v1296 = vadd.f32 0.0, %v1295
    %v1297 = vpop.f32.mrb[0].mxu0
    %v1298 = vpop.f32.mrb[0].mxu0
    %v1299 = vadd.f32 0.0, %v1298
    %v1300 = vpop.f32.mrb[0].mxu0
    %1301 = vmatprep.mubr.bf16.mxu0 0
    %1302 = vmatmul.mubr.bf16.gmra.mrb[0].mxu0 %v1162
    %v1303 = vpop.f32.mrb[0].mxu0
    %v1304 = vadd.f32 0.0, %v1303
    %v1305 = vpop.f32.mrb[0].mxu0
    %v1306 = vpop.f32.mrb[0].mxu0
    %v1307 = vadd.f32 0.0, %v1306
    %v1308 = vpop.f32.mrb[0].mxu0
    %1309 = vmatprep.mubr.bf16.mxu0 0
    %1310 = vmatmul.mubr.bf16.gmra.mrb[0].mxu0 %v1165
    %v1311 = vpop.f32.mrb[0].mxu0
    %v1312 = vadd.f32 0.0, %v1311
    %v1313 = vpop.f32.mrb[0].mxu0
    %v1314 = vpop.f32.mrb[0].mxu0
    %v1315 = vadd.f32 0.0, %v1314
    %v1316 = vpop.f32.mrb[0].mxu0
    %1317 = vmatprep.mubr.bf16.mxu0 0
    %1318 = vmatmul.mubr.bf16.gmra.mrb[0].mxu0 %v1168
    %v1319 = vpop.f32.mrb[0].mxu0
    %v1320 = vadd.f32 0.0, %v1319
    %v1321 = vpop.f32.mrb[0].mxu0
    %v1322 = vpop.f32.mrb[0].mxu0
    %v1323 = vadd.f32 0.0, %v1322
    %v1324 = vpop.f32.mrb[0].mxu0
    %1325 = vmatprep.mubr.bf16.mxu0 0
    %1326 = vmatmul.mubr.bf16.gmra.mrb[0].mxu0 %v1171
    %v1327 = vpop.f32.mrb[0].mxu0
    %v1328 = vadd.f32 0.0, %v1327
    %v1329 = vpop.f32.mrb[0].mxu0
    %v1330 = vpop.f32.mrb[0].mxu0
    %v1331 = vadd.f32 0.0, %v1330
    %v1332 = vpop.f32.mrb[0].mxu0
    %1333 = vdwg.mxu0
    %v1334 = vadd.f32 %v835, %v1208
    %v1335 = vadd.f32 %v838, %v1211
    %v1336 = vadd.f32 %v843, %v1216
    %v1337 = vadd.f32 %v846, %v1219
    %v1338 = vadd.f32 %v851, %v1224
    %v1339 = vadd.f32 %v854, %v1227
    %v1340 = vadd.f32 %v859, %v1232
    %v1341 = vadd.f32 %v862, %v1235
    %v1342 = vadd.f32 %v867, %v1240
    %v1343 = vadd.f32 %v870, %v1243
    %v1344 = vadd.f32 %v875, %v1248
    %v1345 = vadd.f32 %v878, %v1251
    %v1346 = vadd.f32 %v883, %v1256
    %v1347 = vadd.f32 %v886, %v1259
    %v1348 = vadd.f32 %v891, %v1264
    %v1349 = vadd.f32 %v894, %v1267
    %v1350 = vadd.f32 %v899, %v1272
    %v1351 = vadd.f32 %v902, %v1275
    %v1352 = vadd.f32 %v907, %v1280
    %v1353 = vadd.f32 %v910, %v1283
    %v1354 = vadd.f32 %v915, %v1288
    %v1355 = vadd.f32 %v918, %v1291
    %v1356 = vadd.f32 %v923, %v1296
    %v1357 = vadd.f32 %v926, %v1299
    %v1358 = vadd.f32 %v931, %v1304
    %v1359 = vadd.f32 %v934, %v1307
    %v1360 = vadd.f32 %v939, %v1312
    %v1361 = vadd.f32 %v942, %v1315
    %v1362 = vadd.f32 %v947, %v1320
    %v1363 = vadd.f32 %v950, %v1323
    %v1364 = vadd.f32 %v955, %v1328
    %v1365 = vadd.f32 %v958, %v1331
    %v1366 = vld [vmem:[%s2] sm:$0x1]
    %v1368 = vlaneseq
    %v1369 = vshrl.u32 %v1368, 7
    %v1370 = vsub.s32 0, %v1369
    %v1371 = vrot.slane %v1366, %v1370
    %v1373 = vadd.f32 %v1334, %v1371
    %v1374 = vadd.f32 %v1335, %v1371
    %v1375 = vadd.f32 %v1336, %v1371
    %v1376 = vadd.f32 %v1337, %v1371
    %v1377 = vadd.f32 %v1338, %v1371
    %v1378 = vadd.f32 %v1339, %v1371
    %v1379 = vadd.f32 %v1340, %v1371
    %v1380 = vadd.f32 %v1341, %v1371
    %v1381 = vadd.f32 %v1342, %v1371
    %v1382 = vadd.f32 %v1343, %v1371
    %v1383 = vadd.f32 %v1344, %v1371
    %v1384 = vadd.f32 %v1345, %v1371
    %v1385 = vadd.f32 %v1346, %v1371
    %v1386 = vadd.f32 %v1347, %v1371
    %v1387 = vadd.f32 %v1348, %v1371
    %v1388 = vadd.f32 %v1349, %v1371
    %v1389 = vadd.f32 %v1350, %v1371
    %v1390 = vadd.f32 %v1351, %v1371
    %v1391 = vadd.f32 %v1352, %v1371
    %v1392 = vadd.f32 %v1353, %v1371
    %v1393 = vadd.f32 %v1354, %v1371
    %v1394 = vadd.f32 %v1355, %v1371
    %v1395 = vadd.f32 %v1356, %v1371
    %v1396 = vadd.f32 %v1357, %v1371
    %v1397 = vadd.f32 %v1358, %v1371
    %v1398 = vadd.f32 %v1359, %v1371
    %v1399 = vadd.f32 %v1360, %v1371
    %v1400 = vadd.f32 %v1361, %v1371
    %v1401 = vadd.f32 %v1362, %v1371
    %v1402 = vadd.f32 %v1363, %v1371
    %v1403 = vadd.f32 %v1364, %v1371
    %v1404 = vadd.f32 %v1365, %v1371
    %1405 = vadd.xlane.f32.xlu0 %v1373
    %v1406 = vpop.xlane.xlu0 %1405
    %1407 = vadd.xlane.f32.xlu0 %v1374
    %v1408 = vpop.xlane.xlu0 %1407
    %1409 = vadd.xlane.f32.xlu0 %v1375
    %v1410 = vpop.xlane.xlu0 %1409
    %1411 = vadd.xlane.f32.xlu0 %v1376
    %v1412 = vpop.xlane.xlu0 %1411
    %1413 = vadd.xlane.f32.xlu0 %v1377
    %v1414 = vpop.xlane.xlu0 %1413
    %1415 = vadd.xlane.f32.xlu0 %v1378
    %v1416 = vpop.xlane.xlu0 %1415
    %1417 = vadd.xlane.f32.xlu0 %v1379
    %v1418 = vpop.xlane.xlu0 %1417
    %1419 = vadd.xlane.f32.xlu0 %v1380
    %v1420 = vpop.xlane.xlu0 %1419
    %1421 = vadd.xlane.f32.xlu0 %v1381
    %v1422 = vpop.xlane.xlu0 %1421
    %1423 = vadd.xlane.f32.xlu0 %v1382
    %v1424 = vpop.xlane.xlu0 %1423
    %1425 = vadd.xlane.f32.xlu0 %v1383
    %v1426 = vpop.xlane.xlu0 %1425
    %1427 = vadd.xlane.f32.xlu0 %v1384
    %v1428 = vpop.xlane.xlu0 %1427
    %1429 = vadd.xlane.f32.xlu0 %v1385
    %v1430 = vpop.xlane.xlu0 %1429
    %1431 = vadd.xlane.f32.xlu0 %v1386
    %v1432 = vpop.xlane.xlu0 %1431
    %1433 = vadd.xlane.f32.xlu0 %v1387
    %v1434 = vpop.xlane.xlu0 %1433
    %1435 = vadd.xlane.f32.xlu0 %v1388
    %v1436 = vpop.xlane.xlu0 %1435
    %1437 = vadd.xlane.f32.xlu0 %v1389
    %v1438 = vpop.xlane.xlu0 %1437
    %1439 = vadd.xlane.f32.xlu0 %v1390
    %v1440 = vpop.xlane.xlu0 %1439
    %1441 = vadd.xlane.f32.xlu0 %v1391
    %v1442 = vpop.xlane.xlu0 %1441
    %1443 = vadd.xlane.f32.xlu0 %v1392
    %v1444 = vpop.xlane.xlu0 %1443
    %1445 = vadd.xlane.f32.xlu0 %v1393
    %v1446 = vpop.xlane.xlu0 %1445
    %1447 = vadd.xlane.f32.xlu0 %v1394
    %v1448 = vpop.xlane.xlu0 %1447
    %1449 = vadd.xlane.f32.xlu0 %v1395
    %v1450 = vpop.xlane.xlu0 %1449
    %1451 = vadd.xlane.f32.xlu0 %v1396
    %v1452 = vpop.xlane.xlu0 %1451
    %1453 = vadd.xlane.f32.xlu0 %v1397
    %v1454 = vpop.xlane.xlu0 %1453
    %1455 = vadd.xlane.f32.xlu0 %v1398
    %v1456 = vpop.xlane.xlu0 %1455
    %1457 = vadd.xlane.f32.xlu0 %v1399
    %v1458 = vpop.xlane.xlu0 %1457
    %1459 = vadd.xlane.f32.xlu0 %v1400
    %v1460 = vpop.xlane.xlu0 %1459
    %1461 = vadd.xlane.f32.xlu0 %v1401
    %v1462 = vpop.xlane.xlu0 %1461
    %1463 = vadd.xlane.f32.xlu0 %v1402
    %v1464 = vpop.xlane.xlu0 %1463
    %1465 = vadd.xlane.f32.xlu0 %v1403
    %v1466 = vpop.xlane.xlu0 %1465
    %1467 = vadd.xlane.f32.xlu0 %v1404
    %v1468 = vpop.xlane.xlu0 %1467
    %v1469 = vrcp.pop 128.0
    %v1470 = vmul.f32 %v1406, %v1469
    %v1471 = vmul.f32 %v1408, %v1469
    %v1472 = vmul.f32 %v1410, %v1469
    %v1473 = vmul.f32 %v1412, %v1469
    %v1474 = vmul.f32 %v1414, %v1469
    %v1475 = vmul.f32 %v1416, %v1469
    %v1476 = vmul.f32 %v1418, %v1469
    %v1477 = vmul.f32 %v1420, %v1469
    %v1478 = vmul.f32 %v1422, %v1469
    %v1479 = vmul.f32 %v1424, %v1469
    %v1480 = vmul.f32 %v1426, %v1469
    %v1481 = vmul.f32 %v1428, %v1469
    %v1482 = vmul.f32 %v1430, %v1469
    %v1483 = vmul.f32 %v1432, %v1469
    %v1484 = vmul.f32 %v1434, %v1469
    %v1485 = vmul.f32 %v1436, %v1469
    %v1486 = vmul.f32 %v1438, %v1469
    %v1487 = vmul.f32 %v1440, %v1469
    %v1488 = vmul.f32 %v1442, %v1469
    %v1489 = vmul.f32 %v1444, %v1469
    %v1490 = vmul.f32 %v1446, %v1469
    %v1491 = vmul.f32 %v1448, %v1469
    %v1492 = vmul.f32 %v1450, %v1469
    %v1493 = vmul.f32 %v1452, %v1469
    %v1494 = vmul.f32 %v1454, %v1469
    %v1495 = vmul.f32 %v1456, %v1469
    %v1496 = vmul.f32 %v1458, %v1469
    %v1497 = vmul.f32 %v1460, %v1469
    %v1498 = vmul.f32 %v1462, %v1469
    %v1499 = vmul.f32 %v1464, %v1469
    %v1500 = vmul.f32 %v1466, %v1469
    %v1501 = vmul.f32 %v1468, %v1469
    %v1502 = vsub.f32 %v1373, %v1470
    %v1503 = vsub.f32 %v1374, %v1471
    %v1504 = vsub.f32 %v1375, %v1472
    %v1505 = vsub.f32 %v1376, %v1473
    %v1506 = vsub.f32 %v1377, %v1474
    %v1507 = vsub.f32 %v1378, %v1475
    %v1508 = vsub.f32 %v1379, %v1476
    %v1509 = vsub.f32 %v1380, %v1477
    %v1510 = vsub.f32 %v1381, %v1478
    %v1511 = vsub.f32 %v1382, %v1479
    %v1512 = vsub.f32 %v1383, %v1480
    %v1513 = vsub.f32 %v1384, %v1481
    %v1514 = vsub.f32 %v1385, %v1482
    %v1515 = vsub.f32 %v1386, %v1483
    %v1516 = vsub.f32 %v1387, %v1484
    %v1517 = vsub.f32 %v1388, %v1485
    %v1518 = vsub.f32 %v1389, %v1486
    %v1519 = vsub.f32 %v1390, %v1487
    %v1520 = vsub.f32 %v1391, %v1488
    %v1521 = vsub.f32 %v1392, %v1489
    %v1522 = vsub.f32 %v1393, %v1490
    %v1523 = vsub.f32 %v1394, %v1491
    %v1524 = vsub.f32 %v1395, %v1492
    %v1525 = vsub.f32 %v1396, %v1493
    %v1526 = vsub.f32 %v1397, %v1494
    %v1527 = vsub.f32 %v1398, %v1495
    %v1528 = vsub.f32 %v1399, %v1496
    %v1529 = vsub.f32 %v1400, %v1497
    %v1530 = vsub.f32 %v1401, %v1498
    %v1531 = vsub.f32 %v1402, %v1499
    %v1532 = vsub.f32 %v1403, %v1500
    %v1533 = vsub.f32 %v1404, %v1501
    %v1534 = vmul.f32 %v1502, %v1502
    %v1535 = vmul.f32 %v1503, %v1503
    %v1536 = vmul.f32 %v1504, %v1504
    %v1537 = vmul.f32 %v1505, %v1505
    %v1538 = vmul.f32 %v1506, %v1506
    %v1539 = vmul.f32 %v1507, %v1507
    %v1540 = vmul.f32 %v1508, %v1508
    %v1541 = vmul.f32 %v1509, %v1509
    %v1542 = vmul.f32 %v1510, %v1510
    %v1543 = vmul.f32 %v1511, %v1511
    %v1544 = vmul.f32 %v1512, %v1512
    %v1545 = vmul.f32 %v1513, %v1513
    %v1546 = vmul.f32 %v1514, %v1514
    %v1547 = vmul.f32 %v1515, %v1515
    %v1548 = vmul.f32 %v1516, %v1516
    %v1549 = vmul.f32 %v1517, %v1517
    %v1550 = vmul.f32 %v1518, %v1518
    %v1551 = vmul.f32 %v1519, %v1519
    %v1552 = vmul.f32 %v1520, %v1520
    %v1553 = vmul.f32 %v1521, %v1521
    %v1554 = vmul.f32 %v1522, %v1522
    %v1555 = vmul.f32 %v1523, %v1523
    %v1556 = vmul.f32 %v1524, %v1524
    %v1557 = vmul.f32 %v1525, %v1525
    %v1558 = vmul.f32 %v1526, %v1526
    %v1559 = vmul.f32 %v1527, %v1527
    %v1560 = vmul.f32 %v1528, %v1528
    %v1561 = vmul.f32 %v1529, %v1529
    %v1562 = vmul.f32 %v1530, %v1530
    %v1563 = vmul.f32 %v1531, %v1531
    %v1564 = vmul.f32 %v1532, %v1532
    %v1565 = vmul.f32 %v1533, %v1533
    %1566 = vadd.xlane.f32.xlu0 %v1534
    %v1567 = vpop.xlane.xlu0 %1566
    %1568 = vadd.xlane.f32.xlu0 %v1535
    %v1569 = vpop.xlane.xlu0 %1568
    %1570 = vadd.xlane.f32.xlu0 %v1536
    %v1571 = vpop.xlane.xlu0 %1570
    %1572 = vadd.xlane.f32.xlu0 %v1537
    %v1573 = vpop.xlane.xlu0 %1572
    %1574 = vadd.xlane.f32.xlu0 %v1538
    %v1575 = vpop.xlane.xlu0 %1574
    %1576 = vadd.xlane.f32.xlu0 %v1539
    %v1577 = vpop.xlane.xlu0 %1576
    %1578 = vadd.xlane.f32.xlu0 %v1540
    %v1579 = vpop.xlane.xlu0 %1578
    %1580 = vadd.xlane.f32.xlu0 %v1541
    %v1581 = vpop.xlane.xlu0 %1580
    %1582 = vadd.xlane.f32.xlu0 %v1542
    %v1583 = vpop.xlane.xlu0 %1582
    %1584 = vadd.xlane.f32.xlu0 %v1543
    %v1585 = vpop.xlane.xlu0 %1584
    %1586 = vadd.xlane.f32.xlu0 %v1544
    %v1587 = vpop.xlane.xlu0 %1586
    %1588 = vadd.xlane.f32.xlu0 %v1545
    %v1589 = vpop.xlane.xlu0 %1588
    %1590 = vadd.xlane.f32.xlu0 %v1546
    %v1591 = vpop.xlane.xlu0 %1590
    %1592 = vadd.xlane.f32.xlu0 %v1547
    %v1593 = vpop.xlane.xlu0 %1592
    %1594 = vadd.xlane.f32.xlu0 %v1548
    %v1595 = vpop.xlane.xlu0 %1594
    %1596 = vadd.xlane.f32.xlu0 %v1549
    %v1597 = vpop.xlane.xlu0 %1596
    %1598 = vadd.xlane.f32.xlu0 %v1550
    %v1599 = vpop.xlane.xlu0 %1598
    %1600 = vadd.xlane.f32.xlu0 %v1551
    %v1601 = vpop.xlane.xlu0 %1600
    %1602 = vadd.xlane.f32.xlu0 %v1552
    %v1603 = vpop.xlane.xlu0 %1602
    %1604 = vadd.xlane.f32.xlu0 %v1553
    %v1605 = vpop.xlane.xlu0 %1604
    %1606 = vadd.xlane.f32.xlu0 %v1554
    %v1607 = vpop.xlane.xlu0 %1606
    %1608 = vadd.xlane.f32.xlu0 %v1555
    %v1609 = vpop.xlane.xlu0 %1608
    %1610 = vadd.xlane.f32.xlu0 %v1556
    %v1611 = vpop.xlane.xlu0 %1610
    %1612 = vadd.xlane.f32.xlu0 %v1557
    %v1613 = vpop.xlane.xlu0 %1612
    %1614 = vadd.xlane.f32.xlu0 %v1558
    %v1615 = vpop.xlane.xlu0 %1614
    %1616 = vadd.xlane.f32.xlu0 %v1559
    %v1617 = vpop.xlane.xlu0 %1616
    %1618 = vadd.xlane.f32.xlu0 %v1560
    %v1619 = vpop.xlane.xlu0 %1618
    %1620 = vadd.xlane.f32.xlu0 %v1561
    %v1621 = vpop.xlane.xlu0 %1620
    %1622 = vadd.xlane.f32.xlu0 %v1562
    %v1623 = vpop.xlane.xlu0 %1622
    %1624 = vadd.xlane.f32.xlu0 %v1563
    %v1625 = vpop.xlane.xlu0 %1624
    %1626 = vadd.xlane.f32.xlu0 %v1564
    %v1627 = vpop.xlane.xlu0 %1626
    %1628 = vadd.xlane.f32.xlu0 %v1565
    %v1629 = vpop.xlane.xlu0 %1628
    %v1630 = vmul.f32 %v1567, %v1469
    %v1631 = vmul.f32 %v1569, %v1469
    %v1632 = vmul.f32 %v1571, %v1469
    %v1633 = vmul.f32 %v1573, %v1469
    %v1634 = vmul.f32 %v1575, %v1469
    %v1635 = vmul.f32 %v1577, %v1469
    %v1636 = vmul.f32 %v1579, %v1469
    %v1637 = vmul.f32 %v1581, %v1469
    %v1638 = vmul.f32 %v1583, %v1469
    %v1639 = vmul.f32 %v1585, %v1469
    %v1640 = vmul.f32 %v1587, %v1469
    %v1641 = vmul.f32 %v1589, %v1469
    %v1642 = vmul.f32 %v1591, %v1469
    %v1643 = vmul.f32 %v1593, %v1469
    %v1644 = vmul.f32 %v1595, %v1469
    %v1645 = vmul.f32 %v1597, %v1469
    %v1646 = vmul.f32 %v1599, %v1469
    %v1647 = vmul.f32 %v1601, %v1469
    %v1648 = vmul.f32 %v1603, %v1469
    %v1649 = vmul.f32 %v1605, %v1469
    %v1650 = vmul.f32 %v1607, %v1469
    %v1651 = vmul.f32 %v1609, %v1469
    %v1652 = vmul.f32 %v1611, %v1469
    %v1653 = vmul.f32 %v1613, %v1469
    %v1654 = vmul.f32 %v1615, %v1469
    %v1655 = vmul.f32 %v1617, %v1469
    %v1656 = vmul.f32 %v1619, %v1469
    %v1657 = vmul.f32 %v1621, %v1469
    %v1658 = vmul.f32 %v1623, %v1469
    %v1659 = vmul.f32 %v1625, %v1469
    %v1660 = vmul.f32 %v1627, %v1469
    %v1661 = vmul.f32 %v1629, %v1469
    %v1662 = vadd.f32 %v1630, 1e-06
    %v1663 = vadd.f32 %v1631, 1e-06
    %v1664 = vadd.f32 %v1632, 1e-06
    %v1665 = vadd.f32 %v1633, 1e-06
    %v1666 = vadd.f32 %v1634, 1e-06
    %v1667 = vadd.f32 %v1635, 1e-06
    %v1668 = vadd.f32 %v1636, 1e-06
    %v1669 = vadd.f32 %v1637, 1e-06
    %v1670 = vadd.f32 %v1638, 1e-06
    %v1671 = vadd.f32 %v1639, 1e-06
    %v1672 = vadd.f32 %v1640, 1e-06
    %v1673 = vadd.f32 %v1641, 1e-06
    %v1674 = vadd.f32 %v1642, 1e-06
    %v1675 = vadd.f32 %v1643, 1e-06
    %v1676 = vadd.f32 %v1644, 1e-06
    %v1677 = vadd.f32 %v1645, 1e-06
    %v1678 = vadd.f32 %v1646, 1e-06
    %v1679 = vadd.f32 %v1647, 1e-06
    %v1680 = vadd.f32 %v1648, 1e-06
    %v1681 = vadd.f32 %v1649, 1e-06
    %v1682 = vadd.f32 %v1650, 1e-06
    %v1683 = vadd.f32 %v1651, 1e-06
    %v1684 = vadd.f32 %v1652, 1e-06
    %v1685 = vadd.f32 %v1653, 1e-06
    %v1686 = vadd.f32 %v1654, 1e-06
    %v1687 = vadd.f32 %v1655, 1e-06
    %v1688 = vadd.f32 %v1656, 1e-06
    %v1689 = vadd.f32 %v1657, 1e-06
    %v1690 = vadd.f32 %v1658, 1e-06
    %v1691 = vadd.f32 %v1659, 1e-06
    %v1692 = vadd.f32 %v1660, 1e-06
    %v1693 = vadd.f32 %v1661, 1e-06
    %v1694 = vrsqrt.pop %v1662
    %v1695 = vrsqrt.pop %v1663
    %v1696 = vrsqrt.pop %v1664
    %v1697 = vrsqrt.pop %v1665
    %v1698 = vrsqrt.pop %v1666
    %v1699 = vrsqrt.pop %v1667
    %v1700 = vrsqrt.pop %v1668
    %v1701 = vrsqrt.pop %v1669
    %v1702 = vrsqrt.pop %v1670
    %v1703 = vrsqrt.pop %v1671
    %v1704 = vrsqrt.pop %v1672
    %v1705 = vrsqrt.pop %v1673
    %v1706 = vrsqrt.pop %v1674
    %v1707 = vrsqrt.pop %v1675
    %v1708 = vrsqrt.pop %v1676
    %v1709 = vrsqrt.pop %v1677
    %v1710 = vrsqrt.pop %v1678
    %v1711 = vrsqrt.pop %v1679
    %v1712 = vrsqrt.pop %v1680
    %v1713 = vrsqrt.pop %v1681
    %v1714 = vrsqrt.pop %v1682
    %v1715 = vrsqrt.pop %v1683
    %v1716 = vrsqrt.pop %v1684
    %v1717 = vrsqrt.pop %v1685
    %v1718 = vrsqrt.pop %v1686
    %v1719 = vrsqrt.pop %v1687
    %v1720 = vrsqrt.pop %v1688
    %v1721 = vrsqrt.pop %v1689
    %v1722 = vrsqrt.pop %v1690
    %v1723 = vrsqrt.pop %v1691
    %v1724 = vrsqrt.pop %v1692
    %v1725 = vrsqrt.pop %v1693
    %v1726 = vmul.f32 %v1502, %v1694
    %v1727 = vmul.f32 %v1503, %v1695
    %v1728 = vmul.f32 %v1504, %v1696
    %v1729 = vmul.f32 %v1505, %v1697
    %v1730 = vmul.f32 %v1506, %v1698
    %v1731 = vmul.f32 %v1507, %v1699
    %v1732 = vmul.f32 %v1508, %v1700
    %v1733 = vmul.f32 %v1509, %v1701
    %v1734 = vmul.f32 %v1510, %v1702
    %v1735 = vmul.f32 %v1511, %v1703
    %v1736 = vmul.f32 %v1512, %v1704
    %v1737 = vmul.f32 %v1513, %v1705
    %v1738 = vmul.f32 %v1514, %v1706
    %v1739 = vmul.f32 %v1515, %v1707
    %v1740 = vmul.f32 %v1516, %v1708
    %v1741 = vmul.f32 %v1517, %v1709
    %v1742 = vmul.f32 %v1518, %v1710
    %v1743 = vmul.f32 %v1519, %v1711
    %v1744 = vmul.f32 %v1520, %v1712
    %v1745 = vmul.f32 %v1521, %v1713
    %v1746 = vmul.f32 %v1522, %v1714
    %v1747 = vmul.f32 %v1523, %v1715
    %v1748 = vmul.f32 %v1524, %v1716
    %v1749 = vmul.f32 %v1525, %v1717
    %v1750 = vmul.f32 %v1526, %v1718
    %v1751 = vmul.f32 %v1527, %v1719
    %v1752 = vmul.f32 %v1528, %v1720
    %v1753 = vmul.f32 %v1529, %v1721
    %v1754 = vmul.f32 %v1530, %v1722
    %v1755 = vmul.f32 %v1531, %v1723
    %v1756 = vmul.f32 %v1532, %v1724
    %v1757 = vmul.f32 %v1533, %v1725
    %v1758 = vld [vmem:[%s3] sm:$0x1]
    %v1760 = vlaneseq
    %v1761 = vshrl.u32 %v1760, 7
    %v1762 = vsub.s32 0, %v1761
    %v1763 = vrot.slane %v1758, %v1762
    %v1765 = vmul.f32 %v1726, %v1763
    %v1766 = vmul.f32 %v1727, %v1763
    %v1767 = vmul.f32 %v1728, %v1763
    %v1768 = vmul.f32 %v1729, %v1763
    %v1769 = vmul.f32 %v1730, %v1763
    %v1770 = vmul.f32 %v1731, %v1763
    %v1771 = vmul.f32 %v1732, %v1763
    %v1772 = vmul.f32 %v1733, %v1763
    %v1773 = vmul.f32 %v1734, %v1763
    %v1774 = vmul.f32 %v1735, %v1763
    %v1775 = vmul.f32 %v1736, %v1763
    %v1776 = vmul.f32 %v1737, %v1763
    %v1777 = vmul.f32 %v1738, %v1763
    %v1778 = vmul.f32 %v1739, %v1763
    %v1779 = vmul.f32 %v1740, %v1763
    %v1780 = vmul.f32 %v1741, %v1763
    %v1781 = vmul.f32 %v1742, %v1763
    %v1782 = vmul.f32 %v1743, %v1763
    %v1783 = vmul.f32 %v1744, %v1763
    %v1784 = vmul.f32 %v1745, %v1763
    %v1785 = vmul.f32 %v1746, %v1763
    %v1786 = vmul.f32 %v1747, %v1763
    %v1787 = vmul.f32 %v1748, %v1763
    %v1788 = vmul.f32 %v1749, %v1763
    %v1789 = vmul.f32 %v1750, %v1763
    %v1790 = vmul.f32 %v1751, %v1763
    %v1791 = vmul.f32 %v1752, %v1763
    %v1792 = vmul.f32 %v1753, %v1763
    %v1793 = vmul.f32 %v1754, %v1763
    %v1794 = vmul.f32 %v1755, %v1763
    %v1795 = vmul.f32 %v1756, %v1763
    %v1796 = vmul.f32 %v1757, %v1763
    %v1797 = vld [vmem:[%s4] sm:$0x1]
    %v1799 = vlaneseq
    %v1800 = vshrl.u32 %v1799, 7
    %v1801 = vsub.s32 0, %v1800
    %v1802 = vrot.slane %v1797, %v1801
    %v1804 = vadd.f32 %v1765, %v1802
    %v1805 = vadd.f32 %v1766, %v1802
    %v1806 = vadd.f32 %v1767, %v1802
    %v1807 = vadd.f32 %v1768, %v1802
    %v1808 = vadd.f32 %v1769, %v1802
    %v1809 = vadd.f32 %v1770, %v1802
    %v1810 = vadd.f32 %v1771, %v1802
    %v1811 = vadd.f32 %v1772, %v1802
    %v1812 = vadd.f32 %v1773, %v1802
    %v1813 = vadd.f32 %v1774, %v1802
    %v1814 = vadd.f32 %v1775, %v1802
    %v1815 = vadd.f32 %v1776, %v1802
    %v1816 = vadd.f32 %v1777, %v1802
    %v1817 = vadd.f32 %v1778, %v1802
    %v1818 = vadd.f32 %v1779, %v1802
    %v1819 = vadd.f32 %v1780, %v1802
    %v1820 = vadd.f32 %v1781, %v1802
    %v1821 = vadd.f32 %v1782, %v1802
    %v1822 = vadd.f32 %v1783, %v1802
    %v1823 = vadd.f32 %v1784, %v1802
    %v1824 = vadd.f32 %v1785, %v1802
    %v1825 = vadd.f32 %v1786, %v1802
    %v1826 = vadd.f32 %v1787, %v1802
    %v1827 = vadd.f32 %v1788, %v1802
    %v1828 = vadd.f32 %v1789, %v1802
    %v1829 = vadd.f32 %v1790, %v1802
    %v1830 = vadd.f32 %v1791, %v1802
    %v1831 = vadd.f32 %v1792, %v1802
    %v1832 = vadd.f32 %v1793, %v1802
    %v1833 = vadd.f32 %v1794, %v1802
    %v1834 = vadd.f32 %v1795, %v1802
    %v1835 = vadd.f32 %v1796, %v1802
    %1836 = vst [vmem:[#allocation2] sm:$0xff] %v1804
    %1837 = vst [vmem:[#allocation2 + $0x8] sm:$0xff] %v1805
    %1838 = vst [vmem:[#allocation2 + $0x10] sm:$0xff] %v1806
    %1839 = vst [vmem:[#allocation2 + $0x18] sm:$0xff] %v1807
    %1840 = vst [vmem:[#allocation2 + $0x20] sm:$0xff] %v1808
    %1841 = vst [vmem:[#allocation2 + $0x28] sm:$0xff] %v1809
    %1842 = vst [vmem:[#allocation2 + $0x30] sm:$0xff] %v1810
    %1843 = vst [vmem:[#allocation2 + $0x38] sm:$0xff] %v1811
    %1844 = vst [vmem:[#allocation2 + $0x40] sm:$0xff] %v1812
    %1845 = vst [vmem:[#allocation2 + $0x48] sm:$0xff] %v1813
    %1846 = vst [vmem:[#allocation2 + $0x50] sm:$0xff] %v1814
    %1847 = vst [vmem:[#allocation2 + $0x58] sm:$0xff] %v1815
    %1848 = vst [vmem:[#allocation2 + $0x60] sm:$0xff] %v1816
    %1849 = vst [vmem:[#allocation2 + $0x68] sm:$0xff] %v1817
    %1850 = vst [vmem:[#allocation2 + $0x70] sm:$0xff] %v1818
    %1851 = vst [vmem:[#allocation2 + $0x78] sm:$0xff] %v1819
    %1852 = vst [vmem:[#allocation2 + $0x80] sm:$0xff] %v1820
    %1853 = vst [vmem:[#allocation2 + $0x88] sm:$0xff] %v1821
    %1854 = vst [vmem:[#allocation2 + $0x90] sm:$0xff] %v1822
    %1855 = vst [vmem:[#allocation2 + $0x98] sm:$0xff] %v1823
    %1856 = vst [vmem:[#allocation2 + $0xa0] sm:$0xff] %v1824
    %1857 = vst [vmem:[#allocation2 + $0xa8] sm:$0xff] %v1825
    %1858 = vst [vmem:[#allocation2 + $0xb0] sm:$0xff] %v1826
    %1859 = vst [vmem:[#allocation2 + $0xb8] sm:$0xff] %v1827
    %1860 = vst [vmem:[#allocation2 + $0xc0] sm:$0xff] %v1828
    %1861 = vst [vmem:[#allocation2 + $0xc8] sm:$0xff] %v1829
    %1862 = vst [vmem:[#allocation2 + $0xd0] sm:$0xff] %v1830
    %1863 = vst [vmem:[#allocation2 + $0xd8] sm:$0xff] %v1831
    %1864 = vst [vmem:[#allocation2 + $0xe0] sm:$0xff] %v1832
    %1865 = vst [vmem:[#allocation2 + $0xe8] sm:$0xff] %v1833
    %1866 = vst [vmem:[#allocation2 + $0xf0] sm:$0xff] %v1834
    %1867 = vst [vmem:[#allocation2 + $0xf8] sm:$0xff] %v1835
    // Predicated region
    $region22: #{tokenize_conv_forward.1} parent=1 // pred_check
      _
    $region23: #{tokenize_conv_forward.1} parent=1 // pred_check_branch
      %1869 = sbr.rel (0) target = $region25
    $region24: #{tokenize_conv_forward.1} parent=1 // pred_region
      %s1871 = ssub.s32 4096, 4096
      %1872 = vsyncadd [#allocation3], %s1871
      %s1873 = sshll.u32 [#allocation2], 4
      %s1874 = int_to_ptr.vmem [resolvable:$true] %s1873
      %1879 = dma.vmem_to_hbm [thread:$0]  %s1874, 4096, %s5, [#allocation3], 128, 128, 8
    $region25: #{tokenize_conv_forward.1} parent=1 // pred_fallthru
      _
    // Predicated region
    $region26: #{tokenize_conv_forward.1} parent=1 // pred_check
      _
    $region27: #{tokenize_conv_forward.1} parent=1 // pred_check_branch
      %1881 = sbr.rel (0) target = $region29
    $region28: #{tokenize_conv_forward.1} parent=1 // pred_region
      %1882 = dma.done [#allocation3], 4096
    $region29: #{tokenize_conv_forward.1} parent=1 // pred_fallthru
      _
    %1883 = vsyncpa [#allocation3], 1

</llo_original>
